<compile_context>
chip_gen: v7x
topology: tpu7x:2x2x1
jax: 0.10.0
libtpu: 0.0.40
codegen_flags: <defaults>
</compile_context>

<pallas_src>
import jax
import jax.numpy as jnp
from jax.experimental import pallas as pl
from jax.experimental.pallas import tpu as pltpu

EPS = 1e-5
_NEG = -1.0e9   # pad value for A/C rows: forces relu(A_i + C_j) == 0 exactly


# ----------------------------- kernels ------------------------------------ #

def _pair_h1(a, c):
    """h1 = relu(A_i + C_j) for every (i, j) pair of the tile, flattened 2-D.

    a: [TI, H1]    rows = x_i @ W1[:D] + b1 for this tile's i indices
    c: [N_pad, H1] rows = x_j @ W1[D:]      for all j of this batch element
    Returns [TI*N_pad, H1] f32, rows ordered (i-major, j-minor), matching
    pairs.view(-1, 2D) in the PyTorch module.
    """
    ti, h = a.shape
    n = c.shape[0]
    h1 = a[:, None, :] + c[None, :, :]            # [TI, N_pad, H1]
    return jnp.maximum(h1, 0.0).reshape(ti * n, h)


def _bn1_stats_kernel(a_ref, c_ref, sum_ref, sq_ref):
    """Pass 1: per-tile sum / sumsq of h1 (BatchNorm1d(128) batch stats).
    Column reductions run on the (otherwise idle) MXU via a ones-matmul; the
    (8, H1) result slab (all rows identical) is stored unmasked."""
    h1 = _pair_h1(a_ref[0], c_ref[0])                         # f32 [R, H1]
    ones = jnp.ones((8, h1.shape[0]), jnp.bfloat16)
    sum_ref[0, 0] = jnp.dot(ones, h1.astype(jnp.bfloat16),
                            preferred_element_type=jnp.float32)
    sq_ref[0, 0] = jnp.dot(ones, (h1 * h1).astype(jnp.bfloat16),
                           preferred_element_type=jnp.float32)


def _bn2_stats_kernel(a_ref, c_ref, w2_ref, b2_ref, sum_ref, sq_ref):
    """Pass 2: recompute h1, apply folded (BN1 +) Linear2 in bf16, ReLU, store
    this tile's BatchNorm1d(64->128 lanes) partial sums.  Reductions stay on
    the VPU: the MXU is already the binding unit here."""
    h1 = _pair_h1(a_ref[0], c_ref[0])
    h2 = jnp.maximum(
        jnp.dot(h1.astype(jnp.bfloat16), w2_ref[...],
                preferred_element_type=jnp.float32) + b2_ref[...], 0.0)
    sum_ref[0, 0] = jnp.sum(h2, axis=0, keepdims=True)
    sq_ref[0, 0] = jnp.sum(h2 * h2, axis=0, keepdims=True)


def _out_kernel(a_ref, c_ref, w2_ref, b2_ref, w3_ref, b3_ref, o_ref):
    """Pass 3: recompute h1/h2 (bf16 MXU inputs, f32 accumulate) and emit the
    flattened output slab.  BN1/BN2 are folded into (w2, b2) / (w3, b3)."""
    h1 = _pair_h1(a_ref[0], c_ref[0])
    h2 = jnp.maximum(
        jnp.dot(h1.astype(jnp.bfloat16), w2_ref[...],
                preferred_element_type=jnp.float32) + b2_ref[...], 0.0)
    o_ref[0] = (jnp.dot(h2.astype(jnp.bfloat16), w3_ref[...],
                        preferred_element_type=jnp.float32) + b3_ref[...])


# ----------------------------- wrapper ------------------------------------ #

def _hw_budget():
    """(vmem_limit_bytes, max pair rows per tile), generation aware."""
    try:
        cap = int(pltpu.get_tpu_info().vmem_capacity_bytes)
    except Exception:                       # pragma: no cover - conservative
        cap = 64 * 1024 * 1024              # assume v7x-sized VMEM
    vmem_limit = int(min(96 << 20, max(32 << 20, int(cap * 0.7))))
    max_rows = 16384 if cap >= (100 << 20) else 8192
    return vmem_limit, max_rows


def _pick_row_tile(n_pad, max_pair_rows):
    """Rows of obj_i per grid step (TI): multiple of 8 dividing n_pad with
    TI * n_pad <= max_pair_rows so the f32/bf16 h1/h2 temporaries plus the
    lane-padded output double buffers fit every generation's VMEM."""
    cands = [t for t in range(8, n_pad + 1, 8) if n_pad % t == 0]
    good = [t for t in cands if t * n_pad <= max_pair_rows]
    if good:
        return max(good)
    return 8   # bounded fallback: VMEM use linear (not quadratic) in N


def init_params(key, abs_dim):
    """Deterministic Linear-style init (uniform +-1/sqrt(fan_in))."""
    dims = [(abs_dim * 2, 128), (128, 64), (64, 10)]
    params = []
    for i, (fan_in, fan_out) in enumerate(dims):
        kw, kb = jax.random.split(jax.random.fold_in(key, i))
        bound = 1.0 / jnp.sqrt(float(fan_in))
        w = jax.random.uniform(kw, (fan_in, fan_out), jnp.float32, -bound, bound)
        b = jax.random.uniform(kb, (1, fan_out), jnp.float32, -bound, bound)
        params += [w, b]
    return tuple(params)


def relative_attr_predictor(abs_attrs, params):
    """abs_attrs: [B, N, D] -> (rel_attrs [B, N, N, 10], None)."""
    B, N, D = abs_attrs.shape
    w1, b1, w2, b2, w3, b3 = [p.astype(jnp.float32) for p in params]

    H1 = w1.shape[1]                          # 128
    H2 = ((w2.shape[1] + 127) // 128) * 128   # hidden 64 zero-padded to 128
    OUT = w3.shape[1]                         # 10
    M = B * N * N                             # BN batch size (valid pairs only)

    vmem_limit, max_pair_rows = _hw_budget()
    N_pad = ((N + 7) // 8) * 8
    pad = N_pad - N

    # Decomposed first Linear (the pair matrix is never materialized).
    x = abs_attrs.reshape(B * N, D).astype(jnp.float32)
    a = (x @ w1[:D] + b1).reshape(B, N, H1)   # obj_i term, bias folded in
    c = (x @ w1[D:]).reshape(B, N, H1)        # obj_j term
    if pad:
        # -1e9 rows => relu(A_i + C_j) == 0 exactly for every padded pair, so
        # padded pairs are stat-neutral for BN1 and cheap to correct for BN2.
        a = jnp.pad(a, ((0, 0), (0, pad), (0, 0)), constant_values=_NEG)
        c = jnp.pad(c, ((0, 0), (0, pad), (0, 0)), constant_values=_NEG)

    TI = _pick_row_tile(N_pad, max_pair_rows)
    nIT = N_pad // TI
    R = TI * N_pad                            # pair rows per grid step
    grid = (B, nIT)

    a_spec = pl.BlockSpec((1, TI, H1), lambda bi, it: (bi, it, 0))
    c_spec = pl.BlockSpec((1, N_pad, H1), lambda bi, it: (bi, 0, 0))

    def const_spec(shape):                    # resident weights / biases
        return pl.BlockSpec(shape, lambda bi, it, _n=len(shape): (0,) * _n)

    # No cross-step accumulation anywhere -> both grid axes are parallel
    # (full megacore coverage on v7x even when B is small or odd).
    cparams = pltpu.CompilerParams(
        dimension_semantics=("parallel", "parallel"),
        vmem_limit_bytes=vmem_limit)

    # ---- pass 1: BN1 batch statistics (per-tile partial sums) ------------ #
    sum1, sq1 = pl.pallas_call(
        _bn1_stats_kernel,
        out_shape=(jax.ShapeDtypeStruct((B, nIT, 8, H1), jnp.float32),
                   jax.ShapeDtypeStruct((B, nIT, 8, H1), jnp.float32)),
        grid=grid,
        in_specs=[a_spec, c_spec],
        out_specs=(pl.BlockSpec((1, 1, 8, H1), lambda bi, it: (bi, it, 0, 0)),
                   pl.BlockSpec((1, 1, 8, H1), lambda bi, it: (bi, it, 0, 0))),
        compiler_params=cparams,
    )(a, c)
    s1_sum = jnp.sum(sum1, axis=(0, 1))[0]          # (H1,) rows are identical
    s1_sq = jnp.sum(sq1, axis=(0, 1))[0]
    mu1 = s1_sum / M
    var1 = jnp.maximum(s1_sq / M - mu1 * mu1, 0.0)  # biased (training) var
    rsig1 = jax.lax.rsqrt(var1 + EPS)

    # Fold BN1 into the lane-padded second Linear:
    #   BN(h) @ W + b == h @ (rsig*W) + (b - (mu*rsig) @ W)
    w2p = jnp.pad(w2, ((0, 0), (0, H2 - w2.shape[1])))
    b2p = jnp.pad(b2, ((0, 0), (0, H2 - b2.shape[1])))
    w2f = (w2p * rsig1[:, None]).astype(jnp.bfloat16)   # bf16 MXU input
    b2f = b2p - (mu1 * rsig1)[None, :] @ w2p             # f32 bias

    # ---- pass 2: BN2 batch statistics ------------------------------------ #
    sum2, sq2 = pl.pallas_call(
        _bn2_stats_kernel,
        out_shape=(jax.ShapeDtypeStruct((B, nIT, 1, H2), jnp.float32),
                   jax.ShapeDtypeStruct((B, nIT, 1, H2), jnp.float32)),
        grid=grid,
        in_specs=[a_spec, c_spec, const_spec((H1, H2)), const_spec((1, H2))],
        out_specs=(pl.BlockSpec((1, 1, 1, H2), lambda bi, it: (bi, it, 0, 0)),
                   pl.BlockSpec((1, 1, 1, H2), lambda bi, it: (bi, it, 0, 0))),
        compiler_params=cparams,
    )(a, c, w2f, b2f)
    s2_sum = jnp.sum(sum2, axis=(0, 1))[0]          # (H2,)
    s2_sq = jnp.sum(sq2, axis=(0, 1))[0]
    if pad:
        # Every padded pair row has h1 == 0 exactly, so its h2 == relu(b2f):
        # remove that known constant contribution from the BN2 sums.
        n_invalid = B * (N_pad * N_pad - N * N)
        h2_pad = jnp.maximum(b2f[0], 0.0)
        s2_sum = s2_sum - n_invalid * h2_pad
        s2_sq = s2_sq - n_invalid * h2_pad * h2_pad
    mu2 = s2_sum / M
    var2 = jnp.maximum(s2_sq / M - mu2 * mu2, 0.0)
    rsig2 = jax.lax.rsqrt(var2 + EPS)

    # Fold BN2 into the third Linear (rows padded to H2 with zeros).
    w3p = jnp.pad(w3, ((0, H2 - w3.shape[0]), (0, 0)))
    w3f = (w3p * rsig2[:, None]).astype(jnp.bfloat16)    # bf16 MXU input
    b3f = b3 - (mu2 * rsig2)[None, :] @ w3p

    # ---- pass 3: output --------------------------------------------------- #
    out_flat = pl.pallas_call(
        _out_kernel,
        out_shape=jax.ShapeDtypeStruct((B, N_pad * N_pad, OUT), jnp.float32),
        grid=grid,
        in_specs=[a_spec, c_spec, const_spec((H1, H2)), const_spec((1, H2)),
                  const_spec((H2, OUT)), const_spec((1, OUT))],
        out_specs=pl.BlockSpec((1, R, OUT), lambda bi, it: (bi, it, 0)),
        compiler_params=cparams,
    )(a, c, w2f, b2f, w3f, b3f)

    out = out_flat.reshape(B, N_pad, N_pad, OUT)     # free row-major reshape
    if pad:
        out = out[:, :N, :N, :]
    return out, None


# ----------------------------- reference ---------------------------------- #

def _reference(abs_attrs, params):
    """Pure-JAX reference mirroring the PyTorch forward (training-mode BN)."""
    B, N, D = abs_attrs.shape
    obj_i = jnp.broadcast_to(abs_attrs[:, :, None, :], (B, N, N, D))
    obj_j = jnp.broadcast_to(abs_attrs[:, None, :, :], (B, N, N, D))
    x = jnp.concatenate([obj_i, obj_j], axis=-1).reshape(-1, 2 * D)
    w1, b1, w2, b2, w3, b3 = params

    def bn(h):
        mu = jnp.mean(h, axis=0, keepdims=True)
        var = jnp.mean(jnp.square(h - mu), axis=0, keepdims=True)
        return (h - mu) / jnp.sqrt(var + EPS)

    h = bn(jnp.maximum(x @ w1 + b1, 0.0))
    h = bn(jnp.maximum(h @ w2 + b2, 0.0))
    return (h @ w3 + b3).reshape(B, N, N, 10)


if __name__ == "__main__":
    key = jax.random.PRNGKey(0)
    B, N, D = 2, 8, 16                      # abs_dim = 16
    k_in, k_par = jax.random.split(key)
    abs_attrs = jax.random.normal(k_in, (B, N, D), jnp.float32)
    params = init_params(k_par, D)

    fwd = jax.jit(relative_attr_predictor)

    # Primary check (N multiple of 8).  Tolerance reflects bf16 MXU inputs:
    # measured/expected worst-element error ~5e-3 at this scale.
    rel_attrs, aux = fwd(abs_attrs, params)
    rel_attrs = jax.block_until_ready(rel_attrs)
    assert rel_attrs.shape == (B, N, N, 10)
    assert aux is None
    ref = _reference(abs_attrs, params)
    max_err = float(jnp.max(jnp.abs(rel_attrs - ref)))
    assert jnp.allclose(rel_attrs, ref, atol=2e-2, rtol=2e-2), max_err

    # Secondary check exercising the N % 8 != 0 padding path.
    N2 = 6
    abs2 = jax.random.normal(jax.random.fold_in(key, 7), (B, N2, D), jnp.float32)
    rel2, _ = fwd(abs2, params)
    rel2 = jax.block_until_ready(rel2)
    assert rel2.shape == (B, N2, N2, 10)
    ref2 = _reference(abs2, params)
    max_err2 = float(jnp.max(jnp.abs(rel2 - ref2)))
    assert jnp.allclose(rel2, ref2, atol=2e-2, rtol=2e-2), max_err2

    print("KERNEL_OK")
</pallas_src>

<mosaic_0001>
module attributes {stable_mosaic.version = 11 : i64} {
  func.func @_bn1_stats_kernel(%arg0: i32, %arg1: i32, %arg2: memref<1x8x128xf32, #tpu.memory_space<vmem>>, %arg3: memref<1x8x128xf32, #tpu.memory_space<vmem>>, %arg4: memref<1x1x8x128xf32, #tpu.memory_space<vmem>>, %arg5: memref<1x1x8x128xf32, #tpu.memory_space<vmem>>) attributes {dimension_semantics = [#tpu.dimension_semantics<parallel>, #tpu.dimension_semantics<parallel>], iteration_bounds = array<i64: 2, 1>, scalar_prefetch = 0 : i64, scratch_operands = 0 : i64, tpu.core_type = #tpu.core_type<tc>, window_params = [{transform_indices = @transform_0, window_bounds = array<i64: 1, 8, 128>}, {transform_indices = @transform_1, window_bounds = array<i64: 1, 8, 128>}, {transform_indices = @transform_2, window_bounds = array<i64: 1, 1, 8, 128>}, {transform_indices = @transform_3, window_bounds = array<i64: 1, 1, 8, 128>}]} {
    %c0 = arith.constant 0 : index
    %c0_0 = arith.constant 0 : index
    %c0_1 = arith.constant 0 : index
    %0 = vector.load %arg2[%c0, %c0_0, %c0_1] : memref<1x8x128xf32, #tpu.memory_space<vmem>>, vector<1x8x128xf32>
    %1 = vector.shape_cast %0 : vector<1x8x128xf32> to vector<8x128xf32>
    %c0_2 = arith.constant 0 : index
    %c0_3 = arith.constant 0 : index
    %c0_4 = arith.constant 0 : index
    %2 = vector.load %arg3[%c0_2, %c0_3, %c0_4] : memref<1x8x128xf32, #tpu.memory_space<vmem>>, vector<1x8x128xf32>
    %3 = vector.shape_cast %2 : vector<1x8x128xf32> to vector<8x128xf32>
    %4 = vector.shape_cast %1 : vector<8x128xf32> to vector<8x1x128xf32>
    %5 = vector.shape_cast %3 : vector<8x128xf32> to vector<1x8x128xf32>
    %6 = vector.broadcast %4 : vector<8x1x128xf32> to vector<8x8x128xf32>
    %7 = vector.broadcast %5 : vector<1x8x128xf32> to vector<8x8x128xf32>
    %8 = arith.addf %6, %7 : vector<8x8x128xf32>
    %cst = arith.constant 0.000000e+00 : f32
    %9 = vector.broadcast %cst : f32 to vector<8x8x128xf32>
    %10 = arith.maximumf %8, %9 : vector<8x8x128xf32>
    %11 = vector.shape_cast %10 : vector<8x8x128xf32> to vector<64x128xf32>
    %cst_5 = arith.constant 1.000000e+00 : bf16
    %12 = vector.broadcast %cst_5 : bf16 to vector<8x64xbf16>
    %13 = arith.truncf %11 : vector<64x128xf32> to vector<64x128xbf16>
    %cst_6 = arith.constant dense<0.000000e+00> : vector<8x128xf32>
    %14 = tpu.matmul %12, %13, %cst_6 {dimension_numbers = #tpu.dot_dimension_numbers<[1], [0], [0], [1], [0, 0, 1, 1], [], []>} : vector<8x64xbf16>, vector<64x128xbf16>, vector<8x128xf32> -> vector<8x128xf32>
    %c0_7 = arith.constant 0 : index
    %c0_8 = arith.constant 0 : index
    %c0_9 = arith.constant 0 : index
    %c0_10 = arith.constant 0 : index
    %15 = vector.load %arg4[%c0_7, %c0_8, %c0_9, %c0_10] : memref<1x1x8x128xf32, #tpu.memory_space<vmem>>, vector<1x1x8x128xf32>
    %16 = vector.shape_cast %15 : vector<1x1x8x128xf32> to vector<8x128xf32>
    %17 = vector.shape_cast %14 : vector<8x128xf32> to vector<1x1x8x128xf32>
    tpu.vector_store %arg4[%c0_7, %c0_8, %c0_9, %c0_10], %17 {strides = array<i32>} : memref<1x1x8x128xf32, #tpu.memory_space<vmem>>, vector<1x1x8x128xf32>,
    %18 = arith.mulf %11, %11 : vector<64x128xf32>
    %19 = arith.truncf %18 : vector<64x128xf32> to vector<64x128xbf16>
    %cst_11 = arith.constant dense<0.000000e+00> : vector<8x128xf32>
    %20 = tpu.matmul %12, %19, %cst_11 {dimension_numbers = #tpu.dot_dimension_numbers<[1], [0], [0], [1], [0, 0, 1, 1], [], []>} : vector<8x64xbf16>, vector<64x128xbf16>, vector<8x128xf32> -> vector<8x128xf32>
    %c0_12 = arith.constant 0 : index
    %c0_13 = arith.constant 0 : index
    %c0_14 = arith.constant 0 : index
    %c0_15 = arith.constant 0 : index
    %21 = vector.load %arg5[%c0_12, %c0_13, %c0_14, %c0_15] : memref<1x1x8x128xf32, #tpu.memory_space<vmem>>, vector<1x1x8x128xf32>
    %22 = vector.shape_cast %21 : vector<1x1x8x128xf32> to vector<8x128xf32>
    %23 = vector.shape_cast %20 : vector<8x128xf32> to vector<1x1x8x128xf32>
    tpu.vector_store %arg5[%c0_12, %c0_13, %c0_14, %c0_15], %23 {strides = array<i32>} : memref<1x1x8x128xf32, #tpu.memory_space<vmem>>, vector<1x1x8x128xf32>,
    return
  }
  func.func @transform_0(%arg0: i32, %arg1: i32) -> (i32, i32, i32) {
    %c0_i32 = arith.constant 0 : i32
    %c0_i32_0 = arith.constant 0 : i32
    return %arg0, %arg1, %c0_i32 : i32, i32, i32
  }
  func.func @transform_1(%arg0: i32, %arg1: i32) -> (i32, i32, i32) {
    %c0_i32 = arith.constant 0 : i32
    %c0_i32_0 = arith.constant 0 : i32
    %c0_i32_1 = arith.constant 0 : i32
    return %arg0, %c0_i32, %c0_i32_0 : i32, i32, i32
  }
  func.func @transform_2(%arg0: i32, %arg1: i32) -> (i32, i32, i32, i32) {
    %c0_i32 = arith.constant 0 : i32
    %c0_i32_0 = arith.constant 0 : i32
    %c0_i32_1 = arith.constant 0 : i32
    return %arg0, %arg1, %c0_i32, %c0_i32_0 : i32, i32, i32, i32
  }
  func.func @transform_3(%arg0: i32, %arg1: i32) -> (i32, i32, i32, i32) {
    %c0_i32 = arith.constant 0 : i32
    %c0_i32_0 = arith.constant 0 : i32
    %c0_i32_1 = arith.constant 0 : i32
    return %arg0, %arg1, %c0_i32, %c0_i32_0 : i32, i32, i32, i32
  }
}

module attributes {stable_mosaic.version = 11 : i64} {
  func.func @_bn2_stats_kernel(%arg0: i32, %arg1: i32, %arg2: memref<1x8x128xf32, #tpu.memory_space<vmem>>, %arg3: memref<1x8x128xf32, #tpu.memory_space<vmem>>, %arg4: memref<128x128xbf16, #tpu.memory_space<vmem>>, %arg5: memref<1x128xf32, #tpu.memory_space<vmem>>, %arg6: memref<1x1x1x128xf32, #tpu.memory_space<vmem>>, %arg7: memref<1x1x1x128xf32, #tpu.memory_space<vmem>>) attributes {dimension_semantics = [#tpu.dimension_semantics<parallel>, #tpu.dimension_semantics<parallel>], iteration_bounds = array<i64: 2, 1>, scalar_prefetch = 0 : i64, scratch_operands = 0 : i64, tpu.core_type = #tpu.core_type<tc>, window_params = [{transform_indices = @transform_0, window_bounds = array<i64: 1, 8, 128>}, {transform_indices = @transform_1, window_bounds = array<i64: 1, 8, 128>}, {pipeline_mode = #tpu.pipeline_mode<synchronous>, transform_indices = @transform_2, window_bounds = array<i64: 128, 128>}, {pipeline_mode = #tpu.pipeline_mode<synchronous>, transform_indices = @transform_3, window_bounds = array<i64: 1, 128>}, {transform_indices = @transform_4, window_bounds = array<i64: 1, 1, 1, 128>}, {transform_indices = @transform_5, window_bounds = array<i64: 1, 1, 1, 128>}]} {
    %c0 = arith.constant 0 : index
    %c0_0 = arith.constant 0 : index
    %c0_1 = arith.constant 0 : index
    %0 = vector.load %arg2[%c0, %c0_0, %c0_1] : memref<1x8x128xf32, #tpu.memory_space<vmem>>, vector<1x8x128xf32>
    %1 = vector.shape_cast %0 : vector<1x8x128xf32> to vector<8x128xf32>
    %c0_2 = arith.constant 0 : index
    %c0_3 = arith.constant 0 : index
    %c0_4 = arith.constant 0 : index
    %2 = vector.load %arg3[%c0_2, %c0_3, %c0_4] : memref<1x8x128xf32, #tpu.memory_space<vmem>>, vector<1x8x128xf32>
    %3 = vector.shape_cast %2 : vector<1x8x128xf32> to vector<8x128xf32>
    %4 = vector.shape_cast %1 : vector<8x128xf32> to vector<8x1x128xf32>
    %5 = vector.shape_cast %3 : vector<8x128xf32> to vector<1x8x128xf32>
    %6 = vector.broadcast %4 : vector<8x1x128xf32> to vector<8x8x128xf32>
    %7 = vector.broadcast %5 : vector<1x8x128xf32> to vector<8x8x128xf32>
    %8 = arith.addf %6, %7 : vector<8x8x128xf32>
    %cst = arith.constant 0.000000e+00 : f32
    %9 = vector.broadcast %cst : f32 to vector<8x8x128xf32>
    %10 = arith.maximumf %8, %9 : vector<8x8x128xf32>
    %11 = vector.shape_cast %10 : vector<8x8x128xf32> to vector<64x128xf32>
    %12 = arith.truncf %11 : vector<64x128xf32> to vector<64x128xbf16>
    %c0_5 = arith.constant 0 : index
    %c0_6 = arith.constant 0 : index
    %13 = vector.load %arg4[%c0_5, %c0_6] : memref<128x128xbf16, #tpu.memory_space<vmem>>, vector<128x128xbf16>
    %cst_7 = arith.constant dense<0.000000e+00> : vector<64x128xf32>
    %14 = tpu.matmul %12, %13, %cst_7 {dimension_numbers = #tpu.dot_dimension_numbers<[1], [0], [0], [1], [0, 0, 1, 1], [], []>} : vector<64x128xbf16>, vector<128x128xbf16>, vector<64x128xf32> -> vector<64x128xf32>
    %c0_8 = arith.constant 0 : index
    %c0_9 = arith.constant 0 : index
    %15 = vector.load %arg5[%c0_8, %c0_9] : memref<1x128xf32, #tpu.memory_space<vmem>>, vector<1x128xf32>
    %16 = vector.broadcast %15 : vector<1x128xf32> to vector<64x128xf32>
    %17 = arith.addf %14, %16 : vector<64x128xf32>
    %cst_10 = arith.constant 0.000000e+00 : f32
    %18 = vector.broadcast %cst_10 : f32 to vector<64x128xf32>
    %19 = arith.maximumf %17, %18 : vector<64x128xf32>
    %cst_11 = arith.constant dense<0.000000e+00> : vector<128xf32>
    %20 = vector.multi_reduction <add>, %19, %cst_11 [0] : vector<64x128xf32> to vector<128xf32>
    %21 = vector.shape_cast %20 : vector<128xf32> to vector<1x128xf32>
    %c0_12 = arith.constant 0 : index
    %c0_13 = arith.constant 0 : index
    %c0_14 = arith.constant 0 : index
    %c0_15 = arith.constant 0 : index
    %22 = vector.load %arg6[%c0_12, %c0_13, %c0_14, %c0_15] : memref<1x1x1x128xf32, #tpu.memory_space<vmem>>, vector<1x1x1x128xf32>
    %23 = vector.shape_cast %22 : vector<1x1x1x128xf32> to vector<1x128xf32>
    %24 = vector.shape_cast %21 : vector<1x128xf32> to vector<1x1x1x128xf32>
    tpu.vector_store %arg6[%c0_12, %c0_13, %c0_14, %c0_15], %24 {strides = array<i32>} : memref<1x1x1x128xf32, #tpu.memory_space<vmem>>, vector<1x1x1x128xf32>,
    %25 = arith.mulf %19, %19 : vector<64x128xf32>
    %cst_16 = arith.constant dense<0.000000e+00> : vector<128xf32>
    %26 = vector.multi_reduction <add>, %25, %cst_16 [0] : vector<64x128xf32> to vector<128xf32>
    %27 = vector.shape_cast %26 : vector<128xf32> to vector<1x128xf32>
    %c0_17 = arith.constant 0 : index
    %c0_18 = arith.constant 0 : index
    %c0_19 = arith.constant 0 : index
    %c0_20 = arith.constant 0 : index
    %28 = vector.load %arg7[%c0_17, %c0_18, %c0_19, %c0_20] : memref<1x1x1x128xf32, #tpu.memory_space<vmem>>, vector<1x1x1x128xf32>
    %29 = vector.shape_cast %28 : vector<1x1x1x128xf32> to vector<1x128xf32>
    %30 = vector.shape_cast %27 : vector<1x128xf32> to vector<1x1x1x128xf32>
    tpu.vector_store %arg7[%c0_17, %c0_18, %c0_19, %c0_20], %30 {strides = array<i32>} : memref<1x1x1x128xf32, #tpu.memory_space<vmem>>, vector<1x1x1x128xf32>,
    return
  }
  func.func @transform_0(%arg0: i32, %arg1: i32) -> (i32, i32, i32) {
    %c0_i32 = arith.constant 0 : i32
    %c0_i32_0 = arith.constant 0 : i32
    return %arg0, %arg1, %c0_i32 : i32, i32, i32
  }
  func.func @transform_1(%arg0: i32, %arg1: i32) -> (i32, i32, i32) {
    %c0_i32 = arith.constant 0 : i32
    %c0_i32_0 = arith.constant 0 : i32
    %c0_i32_1 = arith.constant 0 : i32
    return %arg0, %c0_i32, %c0_i32_0 : i32, i32, i32
  }
  func.func @transform_2(%arg0: i32, %arg1: i32) -> (i32, i32) {
    %c0_i32 = arith.constant 0 : i32
    %c0_i32_0 = arith.constant 0 : i32
    %c0_i32_1 = arith.constant 0 : i32
    return %c0_i32, %c0_i32_0 : i32, i32
  }
  func.func @transform_3(%arg0: i32, %arg1: i32) -> (i32, i32) {
    %c0_i32 = arith.constant 0 : i32
    %c0_i32_0 = arith.constant 0 : i32
    %c0_i32_1 = arith.constant 0 : i32
    return %c0_i32, %c0_i32_0 : i32, i32
  }
  func.func @transform_4(%arg0: i32, %arg1: i32) -> (i32, i32, i32, i32) {
    %c0_i32 = arith.constant 0 : i32
    %c0_i32_0 = arith.constant 0 : i32
    %c0_i32_1 = arith.constant 0 : i32
    return %arg0, %arg1, %c0_i32, %c0_i32_0 : i32, i32, i32, i32
  }
  func.func @transform_5(%arg0: i32, %arg1: i32) -> (i32, i32, i32, i32) {
    %c0_i32 = arith.constant 0 : i32
    %c0_i32_0 = arith.constant 0 : i32
    %c0_i32_1 = arith.constant 0 : i32
    return %arg0, %arg1, %c0_i32, %c0_i32_0 : i32, i32, i32, i32
  }
}

module attributes {stable_mosaic.version = 11 : i64} {
  func.func @_out_kernel(%arg0: i32, %arg1: i32, %arg2: memref<1x8x128xf32, #tpu.memory_space<vmem>>, %arg3: memref<1x8x128xf32, #tpu.memory_space<vmem>>, %arg4: memref<128x128xbf16, #tpu.memory_space<vmem>>, %arg5: memref<1x128xf32, #tpu.memory_space<vmem>>, %arg6: memref<128x10xbf16, #tpu.memory_space<vmem>>, %arg7: memref<1x10xf32, #tpu.memory_space<vmem>>, %arg8: memref<1x64x10xf32, #tpu.memory_space<vmem>>) attributes {dimension_semantics = [#tpu.dimension_semantics<parallel>, #tpu.dimension_semantics<parallel>], iteration_bounds = array<i64: 2, 1>, scalar_prefetch = 0 : i64, scratch_operands = 0 : i64, tpu.core_type = #tpu.core_type<tc>, window_params = [{transform_indices = @transform_0, window_bounds = array<i64: 1, 8, 128>}, {transform_indices = @transform_1, window_bounds = array<i64: 1, 8, 128>}, {pipeline_mode = #tpu.pipeline_mode<synchronous>, transform_indices = @transform_2, window_bounds = array<i64: 128, 128>}, {pipeline_mode = #tpu.pipeline_mode<synchronous>, transform_indices = @transform_3, window_bounds = array<i64: 1, 128>}, {pipeline_mode = #tpu.pipeline_mode<synchronous>, transform_indices = @transform_4, window_bounds = array<i64: 128, 10>}, {pipeline_mode = #tpu.pipeline_mode<synchronous>, transform_indices = @transform_5, window_bounds = array<i64: 1, 10>}, {transform_indices = @transform_6, window_bounds = array<i64: 1, 64, 10>}]} {
    %c0 = arith.constant 0 : index
    %c0_0 = arith.constant 0 : index
    %c0_1 = arith.constant 0 : index
    %0 = vector.load %arg2[%c0, %c0_0, %c0_1] : memref<1x8x128xf32, #tpu.memory_space<vmem>>, vector<1x8x128xf32>
    %1 = vector.shape_cast %0 : vector<1x8x128xf32> to vector<8x128xf32>
    %c0_2 = arith.constant 0 : index
    %c0_3 = arith.constant 0 : index
    %c0_4 = arith.constant 0 : index
    %2 = vector.load %arg3[%c0_2, %c0_3, %c0_4] : memref<1x8x128xf32, #tpu.memory_space<vmem>>, vector<1x8x128xf32>
    %3 = vector.shape_cast %2 : vector<1x8x128xf32> to vector<8x128xf32>
    %4 = vector.shape_cast %1 : vector<8x128xf32> to vector<8x1x128xf32>
    %5 = vector.shape_cast %3 : vector<8x128xf32> to vector<1x8x128xf32>
    %6 = vector.broadcast %4 : vector<8x1x128xf32> to vector<8x8x128xf32>
    %7 = vector.broadcast %5 : vector<1x8x128xf32> to vector<8x8x128xf32>
    %8 = arith.addf %6, %7 : vector<8x8x128xf32>
    %cst = arith.constant 0.000000e+00 : f32
    %9 = vector.broadcast %cst : f32 to vector<8x8x128xf32>
    %10 = arith.maximumf %8, %9 : vector<8x8x128xf32>
    %11 = vector.shape_cast %10 : vector<8x8x128xf32> to vector<64x128xf32>
    %12 = arith.truncf %11 : vector<64x128xf32> to vector<64x128xbf16>
    %c0_5 = arith.constant 0 : index
    %c0_6 = arith.constant 0 : index
    %13 = vector.load %arg4[%c0_5, %c0_6] : memref<128x128xbf16, #tpu.memory_space<vmem>>, vector<128x128xbf16>
    %cst_7 = arith.constant dense<0.000000e+00> : vector<64x128xf32>
    %14 = tpu.matmul %12, %13, %cst_7 {dimension_numbers = #tpu.dot_dimension_numbers<[1], [0], [0], [1], [0, 0, 1, 1], [], []>} : vector<64x128xbf16>, vector<128x128xbf16>, vector<64x128xf32> -> vector<64x128xf32>
    %c0_8 = arith.constant 0 : index
    %c0_9 = arith.constant 0 : index
    %15 = vector.load %arg5[%c0_8, %c0_9] : memref<1x128xf32, #tpu.memory_space<vmem>>, vector<1x128xf32>
    %16 = vector.broadcast %15 : vector<1x128xf32> to vector<64x128xf32>
    %17 = arith.addf %14, %16 : vector<64x128xf32>
    %cst_10 = arith.constant 0.000000e+00 : f32
    %18 = vector.broadcast %cst_10 : f32 to vector<64x128xf32>
    %19 = arith.maximumf %17, %18 : vector<64x128xf32>
    %20 = arith.truncf %19 : vector<64x128xf32> to vector<64x128xbf16>
    %c0_11 = arith.constant 0 : index
    %c0_12 = arith.constant 0 : index
    %21 = vector.load %arg6[%c0_11, %c0_12] : memref<128x10xbf16, #tpu.memory_space<vmem>>, vector<128x10xbf16>
    %cst_13 = arith.constant dense<0.000000e+00> : vector<64x10xf32>
    %22 = tpu.matmul %20, %21, %cst_13 {dimension_numbers = #tpu.dot_dimension_numbers<[1], [0], [0], [1], [0, 0, 1, 1], [], []>} : vector<64x128xbf16>, vector<128x10xbf16>, vector<64x10xf32> -> vector<64x10xf32>
    %c0_14 = arith.constant 0 : index
    %c0_15 = arith.constant 0 : index
    %23 = vector.load %arg7[%c0_14, %c0_15] : memref<1x10xf32, #tpu.memory_space<vmem>>, vector<1x10xf32>
    %24 = vector.broadcast %23 : vector<1x10xf32> to vector<64x10xf32>
    %25 = arith.addf %22, %24 : vector<64x10xf32>
    %c0_16 = arith.constant 0 : index
    %c0_17 = arith.constant 0 : index
    %c0_18 = arith.constant 0 : index
    %26 = vector.load %arg8[%c0_16, %c0_17, %c0_18] : memref<1x64x10xf32, #tpu.memory_space<vmem>>, vector<1x64x10xf32>
    %27 = vector.shape_cast %26 : vector<1x64x10xf32> to vector<64x10xf32>
    %28 = vector.shape_cast %25 : vector<64x10xf32> to vector<1x64x10xf32>
    tpu.vector_store %arg8[%c0_16, %c0_17, %c0_18], %28 {strides = array<i32>} : memref<1x64x10xf32, #tpu.memory_space<vmem>>, vector<1x64x10xf32>,
    return
  }
  func.func @transform_0(%arg0: i32, %arg1: i32) -> (i32, i32, i32) {
    %c0_i32 = arith.constant 0 : i32
    %c0_i32_0 = arith.constant 0 : i32
    return %arg0, %arg1, %c0_i32 : i32, i32, i32
  }
  func.func @transform_1(%arg0: i32, %arg1: i32) -> (i32, i32, i32) {
    %c0_i32 = arith.constant 0 : i32
    %c0_i32_0 = arith.constant 0 : i32
    %c0_i32_1 = arith.constant 0 : i32
    return %arg0, %c0_i32, %c0_i32_0 : i32, i32, i32
  }
  func.func @transform_2(%arg0: i32, %arg1: i32) -> (i32, i32) {
    %c0_i32 = arith.constant 0 : i32
    %c0_i32_0 = arith.constant 0 : i32
    %c0_i32_1 = arith.constant 0 : i32
    return %c0_i32, %c0_i32_0 : i32, i32
  }
  func.func @transform_3(%arg0: i32, %arg1: i32) -> (i32, i32) {
    %c0_i32 = arith.constant 0 : i32
    %c0_i32_0 = arith.constant 0 : i32
    %c0_i32_1 = arith.constant 0 : i32
    return %c0_i32, %c0_i32_0 : i32, i32
  }
  func.func @transform_4(%arg0: i32, %arg1: i32) -> (i32, i32) {
    %c0_i32 = arith.constant 0 : i32
    %c0_i32_0 = arith.constant 0 : i32
    %c0_i32_1 = arith.constant 0 : i32
    return %c0_i32, %c0_i32_0 : i32, i32
  }
  func.func @transform_5(%arg0: i32, %arg1: i32) -> (i32, i32) {
    %c0_i32 = arith.constant 0 : i32
    %c0_i32_0 = arith.constant 0 : i32
    %c0_i32_1 = arith.constant 0 : i32
    return %c0_i32, %c0_i32_0 : i32, i32
  }
  func.func @transform_6(%arg0: i32, %arg1: i32) -> (i32, i32, i32) {
    %c0_i32 = arith.constant 0 : i32
    %c0_i32_0 = arith.constant 0 : i32
    return %arg0, %arg1, %c0_i32 : i32, i32, i32
  }
}

</mosaic_0001>

<llo_original>
// kernel: relative_attr_predictor.4
$region0: #{relative_attr_predictor.4}
  #allocation0 [shape = 'u32[]', space=smem, size = 0x4, offset = 0x4, fixed_abs, tag = 'smem constant byte address 0x4 - core index']
  #allocation1 [shape = 'u32[144,128]{1,0:T(1,128)}', space=vmem, size = 0x12000, scoped, tag = 'internal scratch']
  %s0 = inlined_call_operand.vmem [shape: f32[2,8,128], index: 0, kind: input, shape index: {}]
  %s1 = inlined_call_operand.vmem [shape: f32[2,8,128], index: 1, kind: input, shape index: {}]
  %s2 = inlined_call_operand.vmem [shape: bf16[128,128], index: 2, kind: input, shape index: {}]
  %s3 = inlined_call_operand.vmem [shape: f32[1,128], index: 3, kind: input, shape index: {}]
  %s4 = inlined_call_operand.vmem [shape: f32[2,1,1,128], index: 4, kind: output, shape index: {0}]
  %s5 = inlined_call_operand.vmem [shape: f32[2,1,1,128], index: 5, kind: output, shape index: {1}]
  %6 = xla_tuple %s4, %s5
  %s7 = sld [smem:[#allocation0]]
  $region57: #{relative_attr_predictor.4} parent=0
    _
  %s9 = ssub.s32 1, %s7
  %s10 = scalar_select 0, %s9, %s7
  loop: start=0, step=1, limit=4
  $region2: #{relative_attr_predictor.4} parent=0 // loop_pre_header
    _
  $region3: #{relative_attr_predictor.4} parent=0 // loop_header
    %s12 = sphi 0, %s16
    %p13 = scmp.ge.s32.totalorder %s12, 4
    %s19 = sphi 0, %s31
    %s20 = sphi 0, %s27
    %s21 = sphi 0, %s19
    %s22 = sphi 0, %s20
    %s23 = sphi 0, %s21
    %s24 = sphi 0, %s22
    %s36 = sphi 0, %s38
    %s39 = sphi 0, %s36
    %s40 = sphi 0, %s39
    %s56 = sphi 0, %s40
    %s62 = sphi 0, %s64
    %s65 = sphi 0, %s62
    %s66 = sphi 0, %s65
    %s82 = sphi 0, %s66
    %s86 = sphi 0, %s86
    %s88 = sphi 0, %s86
    %s89 = sphi 0, %s88
    %s103 = sphi 0, %s89
    %s107 = sphi 0, %s107
    %s109 = sphi 0, %s107
    %s110 = sphi 0, %s109
    %s124 = sphi 0, %s110
    %s132 = sphi 0, %s134
    %s135 = sphi 0, %s132
    %s136 = sphi 0, %s135
    %s152 = sphi 0, %s136
    %s160 = sphi 0, %s162
    %s163 = sphi 0, %s160
    %s164 = sphi 0, %s163
    %s180 = sphi 0, %s164
  $region4: #{relative_attr_predictor.4} parent=0 // loop_header_branch
    %15 = sbr.rel (%p13) target = $region8
  $region5: #{relative_attr_predictor.4} parent=0 // loop_body
    %s17 = ssub.s32 %s12, 1
    %s18 = ssub.s32 %s12, 2
    %s25 = sadd.s32 1, %s20
    %p26 = scmp.ge.s32.totalorder %s25, 1
    %s27 = scalar_select %p26, 0, %s25
    %s28 = sadd.s32 1, %s19
    %s29 = scalar_select %p26, %s28, %s19
    %p30 = scmp.ge.s32.totalorder %s29, 2
    %s31 = scalar_select %p30, 0, %s29
    %s32 = ssub.s32 %s19, %s31
    %s33 = ssub.s32 %s20, %s27
    %s34 = sor.u32 %s32, %s33
    %p35 = scmp.eq.s32.totalorder %s34, 0
    %s37 = sadd.s32 %s36, 1
    %s38 = scalar_select %p35, %s36, %s37
    %p41 = pneg %p35
    %p42 = scmp.eq.s32.totalorder %s12, 1
    %p43 = por %p41, %p42
    %p44 = scmp.ne.s32.totalorder %s36, %s39
    %p45 = scmp.eq.s32.totalorder %s12, 0
    %p46 = por %p44, %p45
    %p47 = scmp.ne.s32.totalorder %s36, %s39
    %p48 = scmp.eq.s32.totalorder %s17, 1
    %p49 = por %p47, %p48
    %p50 = scmp.ne.s32.totalorder %s39, %s40
    %p51 = scmp.eq.s32.totalorder %s17, 0
    %p52 = por %p50, %p51
    %p53 = scmp.ne.s32.totalorder %s39, %s40
    %p54 = scmp.eq.s32.totalorder %s18, 1
    %p55 = por %p53, %p54
    %p57 = scmp.ne.s32.totalorder %s40, %s56
    %p58 = scmp.eq.s32.totalorder %s18, 0
    %p59 = por %p57, %p58
    %s60 = ssub.s32 %s19, %s31
    %p61 = scmp.eq.s32.totalorder %s60, 0
    %s63 = sadd.s32 %s62, 1
    %s64 = scalar_select %p61, %s62, %s63
    %p67 = pneg %p61
    %p68 = scmp.eq.s32.totalorder %s12, 1
    %p69 = por %p67, %p68
    %p70 = scmp.ne.s32.totalorder %s62, %s65
    %p71 = scmp.eq.s32.totalorder %s12, 0
    %p72 = por %p70, %p71
    %p73 = scmp.ne.s32.totalorder %s62, %s65
    %p74 = scmp.eq.s32.totalorder %s17, 1
    %p75 = por %p73, %p74
    %p76 = scmp.ne.s32.totalorder %s65, %s66
    %p77 = scmp.eq.s32.totalorder %s17, 0
    %p78 = por %p76, %p77
    %p79 = scmp.ne.s32.totalorder %s65, %s66
    %p80 = scmp.eq.s32.totalorder %s18, 1
    %p81 = por %p79, %p80
    %p83 = scmp.ne.s32.totalorder %s66, %s82
    %p84 = scmp.eq.s32.totalorder %s18, 0
    %p85 = por %p83, %p84
    %s87 = sadd.s32 %s86, 1
    %p90 = scmp.eq.s32.totalorder %s12, 1
    %p91 = scmp.ne.s32.totalorder %s86, %s88
    %p92 = scmp.eq.s32.totalorder %s12, 0
    %p93 = por %p91, %p92
    %p94 = scmp.ne.s32.totalorder %s86, %s88
    %p95 = scmp.eq.s32.totalorder %s17, 1
    %p96 = por %p94, %p95
    %p97 = scmp.ne.s32.totalorder %s88, %s89
    %p98 = scmp.eq.s32.totalorder %s17, 0
    %p99 = por %p97, %p98
    %p100 = scmp.ne.s32.totalorder %s88, %s89
    %p101 = scmp.eq.s32.totalorder %s18, 1
    %p102 = por %p100, %p101
    %p104 = scmp.ne.s32.totalorder %s89, %s103
    %p105 = scmp.eq.s32.totalorder %s18, 0
    %p106 = por %p104, %p105
    %s108 = sadd.s32 %s107, 1
    %p111 = scmp.eq.s32.totalorder %s12, 1
    %p112 = scmp.ne.s32.totalorder %s107, %s109
    %p113 = scmp.eq.s32.totalorder %s12, 0
    %p114 = por %p112, %p113
    %p115 = scmp.ne.s32.totalorder %s107, %s109
    %p116 = scmp.eq.s32.totalorder %s17, 1
    %p117 = por %p115, %p116
    %p118 = scmp.ne.s32.totalorder %s109, %s110
    %p119 = scmp.eq.s32.totalorder %s17, 0
    %p120 = por %p118, %p119
    %p121 = scmp.ne.s32.totalorder %s109, %s110
    %p122 = scmp.eq.s32.totalorder %s18, 1
    %p123 = por %p121, %p122
    %p125 = scmp.ne.s32.totalorder %s110, %s124
    %p126 = scmp.eq.s32.totalorder %s18, 0
    %p127 = por %p125, %p126
    %s128 = ssub.s32 %s19, %s31
    %s129 = ssub.s32 %s20, %s27
    %s130 = sor.u32 %s128, %s129
    %p131 = scmp.eq.s32.totalorder %s130, 0
    %s133 = sadd.s32 %s132, 1
    %s134 = scalar_select %p131, %s132, %s133
    %p137 = pneg %p131
    %p138 = scmp.eq.s32.totalorder %s12, 1
    %p139 = por %p137, %p138
    %p140 = scmp.ne.s32.totalorder %s132, %s135
    %p141 = scmp.eq.s32.totalorder %s12, 0
    %p142 = por %p140, %p141
    %p143 = scmp.ne.s32.totalorder %s132, %s135
    %p144 = scmp.eq.s32.totalorder %s17, 1
    %p145 = por %p143, %p144
    %p146 = scmp.ne.s32.totalorder %s135, %s136
    %p147 = scmp.eq.s32.totalorder %s17, 0
    %p148 = por %p146, %p147
    %p149 = scmp.ne.s32.totalorder %s135, %s136
    %p150 = scmp.eq.s32.totalorder %s18, 1
    %p151 = por %p149, %p150
    %p153 = scmp.ne.s32.totalorder %s136, %s152
    %p154 = scmp.eq.s32.totalorder %s18, 0
    %p155 = por %p153, %p154
    %s156 = ssub.s32 %s19, %s31
    %s157 = ssub.s32 %s20, %s27
    %s158 = sor.u32 %s156, %s157
    %p159 = scmp.eq.s32.totalorder %s158, 0
    %s161 = sadd.s32 %s160, 1
    %s162 = scalar_select %p159, %s160, %s161
    %p165 = pneg %p159
    %p166 = scmp.eq.s32.totalorder %s12, 1
    %p167 = por %p165, %p166
    %p168 = scmp.ne.s32.totalorder %s160, %s163
    %p169 = scmp.eq.s32.totalorder %s12, 0
    %p170 = por %p168, %p169
    %p171 = scmp.ne.s32.totalorder %s160, %s163
    %p172 = scmp.eq.s32.totalorder %s17, 1
    %p173 = por %p171, %p172
    %p174 = scmp.ne.s32.totalorder %s163, %s164
    %p175 = scmp.eq.s32.totalorder %s17, 0
    %p176 = por %p174, %p175
    %p177 = scmp.ne.s32.totalorder %s163, %s164
    %p178 = scmp.eq.s32.totalorder %s18, 1
    %p179 = por %p177, %p178
    %p181 = scmp.ne.s32.totalorder %s164, %s180
    %p182 = scmp.eq.s32.totalorder %s18, 0
    %p183 = por %p181, %p182
    %p184 = scmp.le.s32.totalorder 1, %s12
    %p185 = scmp.lt.s32.totalorder %s12, 3
    %p186 = pnand %p184, %p185
    %p187 = pneg %p186
    // Predicated region
    $region9: #{relative_attr_predictor.4} parent=5 // pred_check
      _
    $region10: #{relative_attr_predictor.4} parent=5 // pred_check_branch
      %189 = sbr.rel (%p186) target = $region12
    $region11: #{relative_attr_predictor.4} parent=5 // pred_region
      %s190 = ssub.s32 %s12, 1
      // Predicated region
      $region13: #{relative_attr_predictor.4} parent=11 // pred_check
        %p191 = pneg %p99
      $region14: #{relative_attr_predictor.4} parent=11 // pred_check_branch
        %193 = sbr.rel (%p191) target = $region16
      $region15: #{relative_attr_predictor.4} parent=11 // pred_region
        _
      $region16: #{relative_attr_predictor.4} parent=11 // pred_fallthru
        _
      // Predicated region
      $region17: #{relative_attr_predictor.4} parent=11 // pred_check
        %p194 = pneg %p120
      $region18: #{relative_attr_predictor.4} parent=11 // pred_check_branch
        %196 = sbr.rel (%p194) target = $region20
      $region19: #{relative_attr_predictor.4} parent=11 // pred_region
        _
      $region20: #{relative_attr_predictor.4} parent=11 // pred_fallthru
        _
    $region12: #{relative_attr_predictor.4} parent=5 // pred_fallthru
      _
    %p197 = scmp.lt.s32.totalorder %s12, 2
    // Predicated region
    $region21: #{relative_attr_predictor.4} parent=5 // pred_check
      %p198 = pneg %p197
    $region22: #{relative_attr_predictor.4} parent=5 // pred_check_branch
      %200 = sbr.rel (%p198) target = $region24
    $region23: #{relative_attr_predictor.4} parent=5 // pred_region
      // Predicated region
      $region25: #{relative_attr_predictor.4} parent=23 // pred_check
        %p201 = pneg %p46
      $region26: #{relative_attr_predictor.4} parent=23 // pred_check_branch
        %203 = sbr.rel (%p201) target = $region28
      $region27: #{relative_attr_predictor.4} parent=23 // pred_region
        %p204 = scmp.lt.s32.totalorder %s19, 1
        %s205 = scalar_select %p204, %s19, 1
        %p206 = scmp.lt.s32.totalorder %s20, 0
        %s207 = scalar_select %p206, %s20, 0
        %s208 = sadd.s32 %s207, %s205
        %s209 = smul.addr %s208, 8
        %s210 = scalar_lea.vmem %s0, %s209
      $region28: #{relative_attr_predictor.4} parent=23 // pred_fallthru
        _
      // Predicated region
      $region29: #{relative_attr_predictor.4} parent=23 // pred_check
        %p211 = pneg %p72
      $region30: #{relative_attr_predictor.4} parent=23 // pred_check_branch
        %213 = sbr.rel (%p211) target = $region32
      $region31: #{relative_attr_predictor.4} parent=23 // pred_region
        %p214 = scmp.lt.s32.totalorder %s19, 1
        %s215 = scalar_select %p214, %s19, 1
        %s216 = smul.addr %s215, 8
        %s217 = scalar_lea.vmem %s1, %s216
      $region32: #{relative_attr_predictor.4} parent=23 // pred_fallthru
        _
    $region24: #{relative_attr_predictor.4} parent=5 // pred_fallthru
      _
    %p218 = scmp.le.s32.totalorder 1, %s12
    %p219 = scmp.lt.s32.totalorder %s12, 3
    %p220 = pnand %p218, %p219
    %p221 = pneg %p220
    // Predicated region
    $region33: #{relative_attr_predictor.4} parent=5 // pred_check
      _
    $region34: #{relative_attr_predictor.4} parent=5 // pred_check_branch
      %223 = sbr.rel (%p220) target = $region36
    $region35: #{relative_attr_predictor.4} parent=5 // pred_region
      %s224 = ssub.s32 %s12, 1
      %p225 = scmp.lt.s32.totalorder %s21, 1
      %s226 = scalar_select %p225, %s21, 1
      %p227 = scmp.lt.s32.totalorder %s22, 0
      %s228 = scalar_select %p227, %s22, 0
      %s229 = sadd.s32 %s228, %s226
      %s230 = smul.addr %s229, 8
      %s231 = scalar_lea.vmem %s0, %s230
      %p232 = pneg %p52
      %p233 = pneg %p49
      %p234 = scmp.lt.s32.totalorder %s21, 1
      %s235 = scalar_select %p234, %s21, 1
      %s236 = smul.addr %s235, 8
      %s237 = scalar_lea.vmem %s1, %s236
      %p238 = pneg %p78
      %p239 = pneg %p75
      %p240 = pneg %p99
      %p241 = pneg %p96
      %p242 = pneg %p120
      %p243 = pneg %p117
      %p244 = pneg %p148
      %p245 = pneg %p145
      %p246 = scmp.lt.s32.totalorder %s21, 1
      %s247 = scalar_select %p246, %s21, 1
      %p248 = scmp.lt.s32.totalorder %s22, 0
      %s249 = scalar_select %p248, %s22, 0
      %s250 = sadd.s32 %s249, %s247
      %s251 = scalar_lea.vmem %s4, %s250
      %p252 = pneg %p176
      %p253 = pneg %p173
      %p254 = scmp.lt.s32.totalorder %s21, 1
      %s255 = scalar_select %p254, %s21, 1
      %p256 = scmp.lt.s32.totalorder %s22, 0
      %s257 = scalar_select %p256, %s22, 0
      %s258 = sadd.s32 %s257, %s255
      %s259 = scalar_lea.vmem %s5, %s258
      %p260 = scmp.lt.s32.totalorder %s21, 1
      %s261 = scalar_select %p260, %s21, 1
      %p262 = scmp.lt.s32.totalorder %s22, 0
      %s263 = scalar_select %p262, %s22, 0
      %s264 = sadd.s32 %s263, %s261
      %s265 = smul.addr %s264, 8
      %s266 = scalar_lea.vmem %s0, %s265
      %p267 = scmp.lt.s32.totalorder %s21, 1
      %s268 = scalar_select %p267, %s21, 1
      %s269 = smul.addr %s268, 8
      %s270 = scalar_lea.vmem %s1, %s269
      %p271 = scmp.lt.s32.totalorder %s21, 1
      %s272 = scalar_select %p271, %s21, 1
      %p273 = scmp.lt.s32.totalorder %s22, 0
      %s274 = scalar_select %p273, %s22, 0
      %s275 = sadd.s32 %s274, %s272
      %s276 = scalar_lea.vmem %s4, %s275
      %p277 = scmp.lt.s32.totalorder %s21, 1
      %s278 = scalar_select %p277, %s21, 1
      %p279 = scmp.lt.s32.totalorder %s22, 0
      %s280 = scalar_select %p279, %s22, 0
      %s281 = sadd.s32 %s280, %s278
      %s282 = scalar_lea.vmem %s5, %s281
      %v284 = vld [vmem:[%s266] sm:$0xff]
      %v285 = vld [vmem:[%s270] sm:$0xff]
      %v287 = vcombine.high %v284, %v284
      %v289 = vunpack.c.l.s4 1966171168
      %v290 = vunpack.c.0.s8 %v289
      %v291 = vlaneseq
      %v292 = vshrl.u32 %v291, 7
      %v293 = vsub.s32 %v290, %v292
      %v294 = vrot.slane %v284, %v293
      %v296 = vunpack.c.l.s4 1966171168
      %v297 = vunpack.c.0.s8 %v296
      %v298 = vlaneseq
      %v299 = vshrl.u32 %v298, 7
      %v300 = vsub.s32 %v297, %v299
      %v301 = vrot.slane %v287, %v300
      %v302 = vcombine.high %v294, %v294
      %v303 = vcombine.high %v301, %v301
      %v305 = vunpack.c.l.s4 1966171168
      %v306 = vunpack.c.0.s8 %v305
      %v307 = vlaneseq
      %v308 = vshrl.u32 %v307, 7
      %v309 = vsub.s32 %v306, %v308
      %v310 = vrot.slane %v294, %v309
      %v312 = vunpack.c.l.s4 1966171168
      %v313 = vunpack.c.0.s8 %v312
      %v314 = vlaneseq
      %v315 = vshrl.u32 %v314, 7
      %v316 = vsub.s32 %v313, %v315
      %v317 = vrot.slane %v301, %v316
      %v319 = vunpack.c.l.s4 1966171168
      %v320 = vunpack.c.0.s8 %v319
      %v321 = vlaneseq
      %v322 = vshrl.u32 %v321, 7
      %v323 = vsub.s32 %v320, %v322
      %v324 = vrot.slane %v302, %v323
      %v326 = vunpack.c.l.s4 1966171168
      %v327 = vunpack.c.0.s8 %v326
      %v328 = vlaneseq
      %v329 = vshrl.u32 %v328, 7
      %v330 = vsub.s32 %v327, %v329
      %v331 = vrot.slane %v303, %v330
      %v332 = vcombine.high %v310, %v310
      %v333 = vcombine.high %v317, %v317
      %v334 = vcombine.high %v324, %v324
      %v335 = vcombine.high %v331, %v331
      %v336 = vlaneseq
      %v337 = vshrl.u32 %v336, 7
      %v338 = vsub.s32 0, %v337
      %v339 = vrot.slane %v310, %v338
      %v340 = vlaneseq
      %v341 = vshrl.u32 %v340, 7
      %v342 = vsub.s32 0, %v341
      %v343 = vrot.slane %v324, %v342
      %v344 = vlaneseq
      %v345 = vshrl.u32 %v344, 7
      %v346 = vsub.s32 0, %v345
      %v347 = vrot.slane %v332, %v346
      %v348 = vlaneseq
      %v349 = vshrl.u32 %v348, 7
      %v350 = vsub.s32 0, %v349
      %v351 = vrot.slane %v334, %v350
      %v352 = vlaneseq
      %v353 = vshrl.u32 %v352, 7
      %v354 = vsub.s32 0, %v353
      %v355 = vrot.slane %v317, %v354
      %v356 = vlaneseq
      %v357 = vshrl.u32 %v356, 7
      %v358 = vsub.s32 0, %v357
      %v359 = vrot.slane %v331, %v358
      %v360 = vlaneseq
      %v361 = vshrl.u32 %v360, 7
      %v362 = vsub.s32 0, %v361
      %v363 = vrot.slane %v333, %v362
      %v364 = vlaneseq
      %v365 = vshrl.u32 %v364, 7
      %v366 = vsub.s32 0, %v365
      %v367 = vrot.slane %v335, %v366
      %v376 = vadd.f32 %v339, %v285
      %v377 = vadd.f32 %v343, %v285
      %v378 = vadd.f32 %v347, %v285
      %v379 = vadd.f32 %v351, %v285
      %v380 = vadd.f32 %v355, %v285
      %v381 = vadd.f32 %v359, %v285
      %v382 = vadd.f32 %v363, %v285
      %v383 = vadd.f32 %v367, %v285
      %v384 = vmax.f32 %v376, 0.0
      %v385 = vmax.f32 %v377, 0.0
      %v386 = vmax.f32 %v378, 0.0
      %v387 = vmax.f32 %v379, 0.0
      %v388 = vmax.f32 %v380, 0.0
      %v389 = vmax.f32 %v381, 0.0
      %v390 = vmax.f32 %v382, 0.0
      %v391 = vmax.f32 %v383, 0.0
      %v392 = vpack.c.bf16 %v385, %v384
      %v393 = vpack.c.bf16 %v387, %v386
      %v394 = vpack.c.bf16 %v389, %v388
      %v395 = vpack.c.bf16 %v391, %v390
      %v396 = vld [vmem:[%s2] sm:$0xf]
      %v397 = vld [vmem:[%s2 + $0x4] sm:$0xf]
      %v398 = vld [vmem:[%s2 + $0x8] sm:$0xf]
      %v399 = vld [vmem:[%s2 + $0xc] sm:$0xf]
      %v400 = vld [vmem:[%s2 + $0x10] sm:$0xf]
      %v401 = vld [vmem:[%s2 + $0x14] sm:$0xf]
      %v402 = vld [vmem:[%s2 + $0x18] sm:$0xf]
      %v403 = vld [vmem:[%s2 + $0x1c] sm:$0xf]
      %v404 = vld [vmem:[%s2 + $0x20] sm:$0xf]
      %v405 = vld [vmem:[%s2 + $0x24] sm:$0xf]
      %v406 = vld [vmem:[%s2 + $0x28] sm:$0xf]
      %v407 = vld [vmem:[%s2 + $0x2c] sm:$0xf]
      %v408 = vld [vmem:[%s2 + $0x30] sm:$0xf]
      %v409 = vld [vmem:[%s2 + $0x34] sm:$0xf]
      %v410 = vld [vmem:[%s2 + $0x38] sm:$0xf]
      %v411 = vld [vmem:[%s2 + $0x3c] sm:$0xf]
      %v412 = vld [vmem:[%s3] sm:$0x1]
      %v414 = vlaneseq
      %v415 = vshrl.u32 %v414, 7
      %v416 = vsub.s32 0, %v415
      %v417 = vrot.slane %v412, %v416
      %v435 = vunpack.c.l.b16 %v396
      %v436 = vunpack.c.l.b16 %v397
      %v437 = vunpack.c.l.b16 %v398
      %v438 = vunpack.c.l.b16 %v399
      %v439 = vunpack.c.l.b16 %v400
      %v440 = vunpack.c.l.b16 %v401
      %v441 = vunpack.c.l.b16 %v402
      %v442 = vunpack.c.l.b16 %v403
      %v443 = vunpack.c.l.b16 %v404
      %v444 = vunpack.c.l.b16 %v405
      %v445 = vunpack.c.l.b16 %v406
      %v446 = vunpack.c.l.b16 %v407
      %v447 = vunpack.c.l.b16 %v408
      %v448 = vunpack.c.l.b16 %v409
      %v449 = vunpack.c.l.b16 %v410
      %v450 = vunpack.c.l.b16 %v411
      %v451 = vpack.c.b16 %v436, %v435
      %v452 = vpack.c.b16 %v438, %v437
      %v453 = vpack.c.b16 %v440, %v439
      %v454 = vpack.c.b16 %v442, %v441
      %v455 = vpack.c.b16 %v444, %v443
      %v456 = vpack.c.b16 %v446, %v445
      %v457 = vpack.c.b16 %v448, %v447
      %v458 = vpack.c.b16 %v450, %v449
      %467 = vmatprep.subr.bf16.mxu0 0
      %468 = vmatpush1.bf16.msra.mxu0 %v451
      %469 = vmatprep.subr.bf16.mxu0 0
      %470 = vmatpush1.bf16.msra.mxu0 %v452
      %471 = vmatprep.subr.bf16.mxu0 0
      %472 = vmatpush1.bf16.msra.mxu0 %v453
      %473 = vmatprep.subr.bf16.mxu0 0
      %474 = vmatpush1.bf16.msra.mxu0 %v454
      %475 = vmatprep.subr.bf16.mxu0 0
      %476 = vmatpush1.bf16.msra.mxu0 %v455
      %477 = vmatprep.subr.bf16.mxu0 0
      %478 = vmatpush1.bf16.msra.mxu0 %v456
      %479 = vmatprep.subr.bf16.mxu0 0
      %480 = vmatpush1.bf16.msra.mxu0 %v457
      %481 = vmatprep.subr.bf16.mxu0 0
      %482 = vmatpush1.bf16.msra.mxu0 %v458
      %483 = vmatprep.subr.bf16.mxu0 0
      %484 = vmatpush1.bf16.msra.mxu0 0
      %485 = vmatprep.subr.bf16.mxu0 0
      %486 = vmatpush1.bf16.msra.mxu0 0
      %487 = vmatprep.subr.bf16.mxu0 0
      %488 = vmatpush1.bf16.msra.mxu0 0
      %489 = vmatprep.subr.bf16.mxu0 0
      %490 = vmatpush1.bf16.msra.mxu0 0
      %491 = vmatprep.subr.bf16.mxu0 0
      %492 = vmatpush1.bf16.msra.mxu0 0
      %493 = vmatprep.subr.bf16.mxu0 0
      %494 = vmatpush1.bf16.msra.mxu0 0
      %495 = vmatprep.subr.bf16.mxu0 0
      %496 = vmatpush1.bf16.msra.mxu0 0
      %497 = vmatprep.subr.bf16.mxu0 0
      %498 = vmatpush1.bf16.msra.mxu0 0
      %499 = vmatprep.mubr.bf16.mxu0 0
      %500 = vmatmul.mubr.bf16.gmra.mrb[0].mxu0 %v392
      %v501 = vpop.f32.mrb[0].mxu0
      %v502 = vadd.f32 %v417, %v501
      %v503 = vpop.f32.mrb[0].mxu0
      %v504 = vpop.f32.mrb[0].mxu0
      %v505 = vadd.f32 %v417, %v504
      %v506 = vpop.f32.mrb[0].mxu0
      %507 = vmatprep.mubr.bf16.mxu0 0
      %508 = vmatmul.mubr.bf16.gmra.mrb[0].mxu0 %v393
      %v509 = vpop.f32.mrb[0].mxu0
      %v510 = vadd.f32 %v417, %v509
      %v511 = vpop.f32.mrb[0].mxu0
      %v512 = vpop.f32.mrb[0].mxu0
      %v513 = vadd.f32 %v417, %v512
      %v514 = vpop.f32.mrb[0].mxu0
      %515 = vmatprep.mubr.bf16.mxu0 0
      %516 = vmatmul.mubr.bf16.gmra.mrb[0].mxu0 %v394
      %v517 = vpop.f32.mrb[0].mxu0
      %v518 = vadd.f32 %v417, %v517
      %v519 = vpop.f32.mrb[0].mxu0
      %v520 = vpop.f32.mrb[0].mxu0
      %v521 = vadd.f32 %v417, %v520
      %v522 = vpop.f32.mrb[0].mxu0
      %523 = vmatprep.mubr.bf16.mxu0 0
      %524 = vmatmul.mubr.bf16.gmra.mrb[0].mxu0 %v395
      %v525 = vpop.f32.mrb[0].mxu0
      %v526 = vadd.f32 %v417, %v525
      %v527 = vpop.f32.mrb[0].mxu0
      %v528 = vpop.f32.mrb[0].mxu0
      %v529 = vadd.f32 %v417, %v528
      %v530 = vpop.f32.mrb[0].mxu0
      %531 = vdwg.mxu0
      %v532 = vmax.f32 %v502, 0.0
      %v533 = vmax.f32 %v505, 0.0
      %v534 = vmax.f32 %v510, 0.0
      %v535 = vmax.f32 %v513, 0.0
      %v536 = vmax.f32 %v518, 0.0
      %v537 = vmax.f32 %v521, 0.0
      %v538 = vmax.f32 %v526, 0.0
      %v539 = vmax.f32 %v529, 0.0
      %v540 = vadd.f32 %v532, %v533
      %v541 = vadd.f32 %v540, %v534
      %v542 = vadd.f32 %v541, %v535
      %v543 = vadd.f32 %v542, %v536
      %v544 = vadd.f32 %v543, %v537
      %v545 = vadd.f32 %v544, %v538
      %v546 = vadd.f32 %v545, %v539
      %v547 = vrot.slane %v546, 4
      %v548 = vadd.f32 %v546, %v547
      %v549 = vrot.slane %v548, 2
      %v550 = vadd.f32 %v548, %v549
      %v551 = vrot.slane %v550, 1
      %v552 = vadd.f32 %v550, %v551
      %553 = vst [vmem:[%s276] sm:$0x1] %v552
      %v554 = vmul.f32 %v532, %v532
      %v555 = vmul.f32 %v533, %v533
      %v556 = vmul.f32 %v534, %v534
      %v557 = vmul.f32 %v535, %v535
      %v558 = vmul.f32 %v536, %v536
      %v559 = vmul.f32 %v537, %v537
      %v560 = vmul.f32 %v538, %v538
      %v561 = vmul.f32 %v539, %v539
      %v562 = vadd.f32 %v554, %v555
      %v563 = vadd.f32 %v562, %v556
      %v564 = vadd.f32 %v563, %v557
      %v565 = vadd.f32 %v564, %v558
      %v566 = vadd.f32 %v565, %v559
      %v567 = vadd.f32 %v566, %v560
      %v568 = vadd.f32 %v567, %v561
      %v569 = vrot.slane %v568, 4
      %v570 = vadd.f32 %v568, %v569
      %v571 = vrot.slane %v570, 2
      %v572 = vadd.f32 %v570, %v571
      %v573 = vrot.slane %v572, 1
      %v574 = vadd.f32 %v572, %v573
      %575 = vst [vmem:[%s282] sm:$0x1] %v574
      %p576 = scmp.lt.s32.totalorder %s21, 1
      %s577 = scalar_select %p576, %s21, 1
      %p578 = scmp.lt.s32.totalorder %s22, 0
      %s579 = scalar_select %p578, %s22, 0
      %s580 = sadd.s32 %s579, %s577
      %s581 = scalar_lea.vmem %s4, %s580
      %p582 = scmp.lt.s32.totalorder %s21, 1
      %s583 = scalar_select %p582, %s21, 1
      %p584 = scmp.lt.s32.totalorder %s22, 0
      %s585 = scalar_select %p584, %s22, 0
      %s586 = sadd.s32 %s585, %s583
      %s587 = scalar_lea.vmem %s5, %s586
      // Predicated region
      $region37: #{relative_attr_predictor.4} parent=35 // pred_check
        %p588 = pneg %p145
      $region38: #{relative_attr_predictor.4} parent=35 // pred_check_branch
        %590 = sbr.rel (%p588) target = $region40
      $region39: #{relative_attr_predictor.4} parent=35 // pred_region
        _
      $region40: #{relative_attr_predictor.4} parent=35 // pred_fallthru
        _
      // Predicated region
      $region41: #{relative_attr_predictor.4} parent=35 // pred_check
        %p591 = pneg %p173
      $region42: #{relative_attr_predictor.4} parent=35 // pred_check_branch
        %593 = sbr.rel (%p591) target = $region44
      $region43: #{relative_attr_predictor.4} parent=35 // pred_region
        _
      $region44: #{relative_attr_predictor.4} parent=35 // pred_fallthru
        _
    $region36: #{relative_attr_predictor.4} parent=5 // pred_fallthru
      _
    %p594 = scmp.le.s32.totalorder 2, %s12
    // Predicated region
    $region45: #{relative_attr_predictor.4} parent=5 // pred_check
      %p595 = pneg %p594
    $region46: #{relative_attr_predictor.4} parent=5 // pred_check_branch
      %597 = sbr.rel (%p595) target = $region48
    $region47: #{relative_attr_predictor.4} parent=5 // pred_region
      %s598 = ssub.s32 %s12, 2
      // Predicated region
      $region49: #{relative_attr_predictor.4} parent=47 // pred_check
        %p599 = pneg %p151
      $region50: #{relative_attr_predictor.4} parent=47 // pred_check_branch
        %601 = sbr.rel (%p599) target = $region52
      $region51: #{relative_attr_predictor.4} parent=47 // pred_region
        %p602 = scmp.lt.s32.totalorder %s23, 1
        %s603 = scalar_select %p602, %s23, 1
        %p604 = scmp.lt.s32.totalorder %s24, 0
        %s605 = scalar_select %p604, %s24, 0
        %s606 = sadd.s32 %s605, %s603
        %s607 = scalar_lea.vmem %s4, %s606
      $region52: #{relative_attr_predictor.4} parent=47 // pred_fallthru
        _
      // Predicated region
      $region53: #{relative_attr_predictor.4} parent=47 // pred_check
        %p608 = pneg %p179
      $region54: #{relative_attr_predictor.4} parent=47 // pred_check_branch
        %610 = sbr.rel (%p608) target = $region56
      $region55: #{relative_attr_predictor.4} parent=47 // pred_region
        %p611 = scmp.lt.s32.totalorder %s23, 1
        %s612 = scalar_select %p611, %s23, 1
        %p613 = scmp.lt.s32.totalorder %s24, 0
        %s614 = scalar_select %p613, %s24, 0
        %s615 = sadd.s32 %s614, %s612
        %s616 = scalar_lea.vmem %s5, %s615
      $region56: #{relative_attr_predictor.4} parent=47 // pred_fallthru
        _
    $region48: #{relative_attr_predictor.4} parent=5 // pred_fallthru
      _
  $region6: #{relative_attr_predictor.4} parent=0 // loop_footer
    %s16 = sadd.s32 1, %s12
  $region7: #{relative_attr_predictor.4} parent=0 // loop_footer_branch
    %11 = sbr.rel target = $region3
  $region8: #{relative_attr_predictor.4} parent=0 // loop_exit
    _

// kernel: relative_attr_predictor.3
$region0: #{relative_attr_predictor.3}
  #allocation0 [shape = 'u32[]', space=smem, size = 0x4, offset = 0x4, fixed_abs, tag = 'smem constant byte address 0x4 - core index']
  #allocation1 [shape = 'u32[144,128]{1,0:T(1,128)}', space=vmem, size = 0x12000, scoped, tag = 'internal scratch']
  %s0 = inlined_call_operand.vmem [shape: f32[2,8,128], index: 0, kind: input, shape index: {}]
  %s1 = inlined_call_operand.vmem [shape: f32[2,8,128], index: 1, kind: input, shape index: {}]
  %s2 = inlined_call_operand.vmem [shape: f32[2,1,8,128], index: 2, kind: output, shape index: {0}]
  %s3 = inlined_call_operand.vmem [shape: f32[2,1,8,128], index: 3, kind: output, shape index: {1}]
  %4 = xla_tuple %s2, %s3
  %s5 = sld [smem:[#allocation0]]
  $region49: #{relative_attr_predictor.3} parent=0
    _
  %s7 = ssub.s32 1, %s5
  %s8 = scalar_select 0, %s7, %s5
  loop: start=0, step=1, limit=4
  $region2: #{relative_attr_predictor.3} parent=0 // loop_pre_header
    _
  $region3: #{relative_attr_predictor.3} parent=0 // loop_header
    %s10 = sphi 0, %s14
    %p11 = scmp.ge.s32.totalorder %s10, 4
    %s17 = sphi 0, %s29
    %s18 = sphi 0, %s25
    %s19 = sphi 0, %s17
    %s20 = sphi 0, %s18
    %s21 = sphi 0, %s19
    %s22 = sphi 0, %s20
    %s34 = sphi 0, %s36
    %s37 = sphi 0, %s34
    %s38 = sphi 0, %s37
    %s54 = sphi 0, %s38
    %s60 = sphi 0, %s62
    %s63 = sphi 0, %s60
    %s64 = sphi 0, %s63
    %s80 = sphi 0, %s64
    %s88 = sphi 0, %s90
    %s91 = sphi 0, %s88
    %s92 = sphi 0, %s91
    %s108 = sphi 0, %s92
    %s116 = sphi 0, %s118
    %s119 = sphi 0, %s116
    %s120 = sphi 0, %s119
    %s136 = sphi 0, %s120
  $region4: #{relative_attr_predictor.3} parent=0 // loop_header_branch
    %13 = sbr.rel (%p11) target = $region8
  $region5: #{relative_attr_predictor.3} parent=0 // loop_body
    %s15 = ssub.s32 %s10, 1
    %s16 = ssub.s32 %s10, 2
    %s23 = sadd.s32 1, %s18
    %p24 = scmp.ge.s32.totalorder %s23, 1
    %s25 = scalar_select %p24, 0, %s23
    %s26 = sadd.s32 1, %s17
    %s27 = scalar_select %p24, %s26, %s17
    %p28 = scmp.ge.s32.totalorder %s27, 2
    %s29 = scalar_select %p28, 0, %s27
    %s30 = ssub.s32 %s17, %s29
    %s31 = ssub.s32 %s18, %s25
    %s32 = sor.u32 %s30, %s31
    %p33 = scmp.eq.s32.totalorder %s32, 0
    %s35 = sadd.s32 %s34, 1
    %s36 = scalar_select %p33, %s34, %s35
    %p39 = pneg %p33
    %p40 = scmp.eq.s32.totalorder %s10, 1
    %p41 = por %p39, %p40
    %p42 = scmp.ne.s32.totalorder %s34, %s37
    %p43 = scmp.eq.s32.totalorder %s10, 0
    %p44 = por %p42, %p43
    %p45 = scmp.ne.s32.totalorder %s34, %s37
    %p46 = scmp.eq.s32.totalorder %s15, 1
    %p47 = por %p45, %p46
    %p48 = scmp.ne.s32.totalorder %s37, %s38
    %p49 = scmp.eq.s32.totalorder %s15, 0
    %p50 = por %p48, %p49
    %p51 = scmp.ne.s32.totalorder %s37, %s38
    %p52 = scmp.eq.s32.totalorder %s16, 1
    %p53 = por %p51, %p52
    %p55 = scmp.ne.s32.totalorder %s38, %s54
    %p56 = scmp.eq.s32.totalorder %s16, 0
    %p57 = por %p55, %p56
    %s58 = ssub.s32 %s17, %s29
    %p59 = scmp.eq.s32.totalorder %s58, 0
    %s61 = sadd.s32 %s60, 1
    %s62 = scalar_select %p59, %s60, %s61
    %p65 = pneg %p59
    %p66 = scmp.eq.s32.totalorder %s10, 1
    %p67 = por %p65, %p66
    %p68 = scmp.ne.s32.totalorder %s60, %s63
    %p69 = scmp.eq.s32.totalorder %s10, 0
    %p70 = por %p68, %p69
    %p71 = scmp.ne.s32.totalorder %s60, %s63
    %p72 = scmp.eq.s32.totalorder %s15, 1
    %p73 = por %p71, %p72
    %p74 = scmp.ne.s32.totalorder %s63, %s64
    %p75 = scmp.eq.s32.totalorder %s15, 0
    %p76 = por %p74, %p75
    %p77 = scmp.ne.s32.totalorder %s63, %s64
    %p78 = scmp.eq.s32.totalorder %s16, 1
    %p79 = por %p77, %p78
    %p81 = scmp.ne.s32.totalorder %s64, %s80
    %p82 = scmp.eq.s32.totalorder %s16, 0
    %p83 = por %p81, %p82
    %s84 = ssub.s32 %s17, %s29
    %s85 = ssub.s32 %s18, %s25
    %s86 = sor.u32 %s84, %s85
    %p87 = scmp.eq.s32.totalorder %s86, 0
    %s89 = sadd.s32 %s88, 1
    %s90 = scalar_select %p87, %s88, %s89
    %p93 = pneg %p87
    %p94 = scmp.eq.s32.totalorder %s10, 1
    %p95 = por %p93, %p94
    %p96 = scmp.ne.s32.totalorder %s88, %s91
    %p97 = scmp.eq.s32.totalorder %s10, 0
    %p98 = por %p96, %p97
    %p99 = scmp.ne.s32.totalorder %s88, %s91
    %p100 = scmp.eq.s32.totalorder %s15, 1
    %p101 = por %p99, %p100
    %p102 = scmp.ne.s32.totalorder %s91, %s92
    %p103 = scmp.eq.s32.totalorder %s15, 0
    %p104 = por %p102, %p103
    %p105 = scmp.ne.s32.totalorder %s91, %s92
    %p106 = scmp.eq.s32.totalorder %s16, 1
    %p107 = por %p105, %p106
    %p109 = scmp.ne.s32.totalorder %s92, %s108
    %p110 = scmp.eq.s32.totalorder %s16, 0
    %p111 = por %p109, %p110
    %s112 = ssub.s32 %s17, %s29
    %s113 = ssub.s32 %s18, %s25
    %s114 = sor.u32 %s112, %s113
    %p115 = scmp.eq.s32.totalorder %s114, 0
    %s117 = sadd.s32 %s116, 1
    %s118 = scalar_select %p115, %s116, %s117
    %p121 = pneg %p115
    %p122 = scmp.eq.s32.totalorder %s10, 1
    %p123 = por %p121, %p122
    %p124 = scmp.ne.s32.totalorder %s116, %s119
    %p125 = scmp.eq.s32.totalorder %s10, 0
    %p126 = por %p124, %p125
    %p127 = scmp.ne.s32.totalorder %s116, %s119
    %p128 = scmp.eq.s32.totalorder %s15, 1
    %p129 = por %p127, %p128
    %p130 = scmp.ne.s32.totalorder %s119, %s120
    %p131 = scmp.eq.s32.totalorder %s15, 0
    %p132 = por %p130, %p131
    %p133 = scmp.ne.s32.totalorder %s119, %s120
    %p134 = scmp.eq.s32.totalorder %s16, 1
    %p135 = por %p133, %p134
    %p137 = scmp.ne.s32.totalorder %s120, %s136
    %p138 = scmp.eq.s32.totalorder %s16, 0
    %p139 = por %p137, %p138
    %p140 = scmp.le.s32.totalorder 1, %s10
    %p141 = scmp.lt.s32.totalorder %s10, 3
    %p142 = pnand %p140, %p141
    %p143 = pneg %p142
    // Predicated region
    $region9: #{relative_attr_predictor.3} parent=5 // pred_check
      _
    $region10: #{relative_attr_predictor.3} parent=5 // pred_check_branch
      %145 = sbr.rel (%p142) target = $region12
    $region11: #{relative_attr_predictor.3} parent=5 // pred_region
      %s146 = ssub.s32 %s10, 1
    $region12: #{relative_attr_predictor.3} parent=5 // pred_fallthru
      _
    %p147 = scmp.lt.s32.totalorder %s10, 2
    // Predicated region
    $region13: #{relative_attr_predictor.3} parent=5 // pred_check
      %p148 = pneg %p147
    $region14: #{relative_attr_predictor.3} parent=5 // pred_check_branch
      %150 = sbr.rel (%p148) target = $region16
    $region15: #{relative_attr_predictor.3} parent=5 // pred_region
      // Predicated region
      $region17: #{relative_attr_predictor.3} parent=15 // pred_check
        %p151 = pneg %p44
      $region18: #{relative_attr_predictor.3} parent=15 // pred_check_branch
        %153 = sbr.rel (%p151) target = $region20
      $region19: #{relative_attr_predictor.3} parent=15 // pred_region
        %p154 = scmp.lt.s32.totalorder %s17, 1
        %s155 = scalar_select %p154, %s17, 1
        %p156 = scmp.lt.s32.totalorder %s18, 0
        %s157 = scalar_select %p156, %s18, 0
        %s158 = sadd.s32 %s157, %s155
        %s159 = smul.addr %s158, 8
        %s160 = scalar_lea.vmem %s0, %s159
      $region20: #{relative_attr_predictor.3} parent=15 // pred_fallthru
        _
      // Predicated region
      $region21: #{relative_attr_predictor.3} parent=15 // pred_check
        %p161 = pneg %p70
      $region22: #{relative_attr_predictor.3} parent=15 // pred_check_branch
        %163 = sbr.rel (%p161) target = $region24
      $region23: #{relative_attr_predictor.3} parent=15 // pred_region
        %p164 = scmp.lt.s32.totalorder %s17, 1
        %s165 = scalar_select %p164, %s17, 1
        %s166 = smul.addr %s165, 8
        %s167 = scalar_lea.vmem %s1, %s166
      $region24: #{relative_attr_predictor.3} parent=15 // pred_fallthru
        _
    $region16: #{relative_attr_predictor.3} parent=5 // pred_fallthru
      _
    %p168 = scmp.le.s32.totalorder 1, %s10
    %p169 = scmp.lt.s32.totalorder %s10, 3
    %p170 = pnand %p168, %p169
    %p171 = pneg %p170
    // Predicated region
    $region25: #{relative_attr_predictor.3} parent=5 // pred_check
      _
    $region26: #{relative_attr_predictor.3} parent=5 // pred_check_branch
      %173 = sbr.rel (%p170) target = $region28
    $region27: #{relative_attr_predictor.3} parent=5 // pred_region
      %s174 = ssub.s32 %s10, 1
      %p175 = scmp.lt.s32.totalorder %s19, 1
      %s176 = scalar_select %p175, %s19, 1
      %p177 = scmp.lt.s32.totalorder %s20, 0
      %s178 = scalar_select %p177, %s20, 0
      %s179 = sadd.s32 %s178, %s176
      %s180 = smul.addr %s179, 8
      %s181 = scalar_lea.vmem %s0, %s180
      %p182 = pneg %p50
      %p183 = pneg %p47
      %p184 = scmp.lt.s32.totalorder %s19, 1
      %s185 = scalar_select %p184, %s19, 1
      %s186 = smul.addr %s185, 8
      %s187 = scalar_lea.vmem %s1, %s186
      %p188 = pneg %p76
      %p189 = pneg %p73
      %p190 = pneg %p104
      %p191 = pneg %p101
      %p192 = scmp.lt.s32.totalorder %s19, 1
      %s193 = scalar_select %p192, %s19, 1
      %p194 = scmp.lt.s32.totalorder %s20, 0
      %s195 = scalar_select %p194, %s20, 0
      %s196 = sadd.s32 %s195, %s193
      %s197 = smul.addr %s196, 8
      %s198 = scalar_lea.vmem %s2, %s197
      %p199 = pneg %p132
      %p200 = pneg %p129
      %p201 = scmp.lt.s32.totalorder %s19, 1
      %s202 = scalar_select %p201, %s19, 1
      %p203 = scmp.lt.s32.totalorder %s20, 0
      %s204 = scalar_select %p203, %s20, 0
      %s205 = sadd.s32 %s204, %s202
      %s206 = smul.addr %s205, 8
      %s207 = scalar_lea.vmem %s3, %s206
      %p208 = scmp.lt.s32.totalorder %s19, 1
      %s209 = scalar_select %p208, %s19, 1
      %p210 = scmp.lt.s32.totalorder %s20, 0
      %s211 = scalar_select %p210, %s20, 0
      %s212 = sadd.s32 %s211, %s209
      %s213 = smul.addr %s212, 8
      %s214 = scalar_lea.vmem %s0, %s213
      %p215 = scmp.lt.s32.totalorder %s19, 1
      %s216 = scalar_select %p215, %s19, 1
      %s217 = smul.addr %s216, 8
      %s218 = scalar_lea.vmem %s1, %s217
      %p219 = scmp.lt.s32.totalorder %s19, 1
      %s220 = scalar_select %p219, %s19, 1
      %p221 = scmp.lt.s32.totalorder %s20, 0
      %s222 = scalar_select %p221, %s20, 0
      %s223 = sadd.s32 %s222, %s220
      %s224 = smul.addr %s223, 8
      %s225 = scalar_lea.vmem %s2, %s224
      %p226 = scmp.lt.s32.totalorder %s19, 1
      %s227 = scalar_select %p226, %s19, 1
      %p228 = scmp.lt.s32.totalorder %s20, 0
      %s229 = scalar_select %p228, %s20, 0
      %s230 = sadd.s32 %s229, %s227
      %s231 = smul.addr %s230, 8
      %s232 = scalar_lea.vmem %s3, %s231
      %v235 = vld [vmem:[%s214] sm:$0xff]
      %v236 = vld [vmem:[%s218] sm:$0xff]
      %v238 = vcombine.high %v235, %v235
      %v240 = vunpack.c.l.s4 1966171168
      %v241 = vunpack.c.0.s8 %v240
      %v242 = vlaneseq
      %v243 = vshrl.u32 %v242, 7
      %v244 = vsub.s32 %v241, %v243
      %v245 = vrot.slane %v235, %v244
      %v247 = vunpack.c.l.s4 1966171168
      %v248 = vunpack.c.0.s8 %v247
      %v249 = vlaneseq
      %v250 = vshrl.u32 %v249, 7
      %v251 = vsub.s32 %v248, %v250
      %v252 = vrot.slane %v238, %v251
      %v253 = vcombine.high %v245, %v245
      %v254 = vcombine.high %v252, %v252
      %v256 = vunpack.c.l.s4 1966171168
      %v257 = vunpack.c.0.s8 %v256
      %v258 = vlaneseq
      %v259 = vshrl.u32 %v258, 7
      %v260 = vsub.s32 %v257, %v259
      %v261 = vrot.slane %v245, %v260
      %v263 = vunpack.c.l.s4 1966171168
      %v264 = vunpack.c.0.s8 %v263
      %v265 = vlaneseq
      %v266 = vshrl.u32 %v265, 7
      %v267 = vsub.s32 %v264, %v266
      %v268 = vrot.slane %v252, %v267
      %v270 = vunpack.c.l.s4 1966171168
      %v271 = vunpack.c.0.s8 %v270
      %v272 = vlaneseq
      %v273 = vshrl.u32 %v272, 7
      %v274 = vsub.s32 %v271, %v273
      %v275 = vrot.slane %v253, %v274
      %v277 = vunpack.c.l.s4 1966171168
      %v278 = vunpack.c.0.s8 %v277
      %v279 = vlaneseq
      %v280 = vshrl.u32 %v279, 7
      %v281 = vsub.s32 %v278, %v280
      %v282 = vrot.slane %v254, %v281
      %v283 = vcombine.high %v261, %v261
      %v284 = vcombine.high %v268, %v268
      %v285 = vcombine.high %v275, %v275
      %v286 = vcombine.high %v282, %v282
      %v287 = vlaneseq
      %v288 = vshrl.u32 %v287, 7
      %v289 = vsub.s32 0, %v288
      %v290 = vrot.slane %v261, %v289
      %v291 = vlaneseq
      %v292 = vshrl.u32 %v291, 7
      %v293 = vsub.s32 0, %v292
      %v294 = vrot.slane %v275, %v293
      %v295 = vlaneseq
      %v296 = vshrl.u32 %v295, 7
      %v297 = vsub.s32 0, %v296
      %v298 = vrot.slane %v283, %v297
      %v299 = vlaneseq
      %v300 = vshrl.u32 %v299, 7
      %v301 = vsub.s32 0, %v300
      %v302 = vrot.slane %v285, %v301
      %v303 = vlaneseq
      %v304 = vshrl.u32 %v303, 7
      %v305 = vsub.s32 0, %v304
      %v306 = vrot.slane %v268, %v305
      %v307 = vlaneseq
      %v308 = vshrl.u32 %v307, 7
      %v309 = vsub.s32 0, %v308
      %v310 = vrot.slane %v282, %v309
      %v311 = vlaneseq
      %v312 = vshrl.u32 %v311, 7
      %v313 = vsub.s32 0, %v312
      %v314 = vrot.slane %v284, %v313
      %v315 = vlaneseq
      %v316 = vshrl.u32 %v315, 7
      %v317 = vsub.s32 0, %v316
      %v318 = vrot.slane %v286, %v317
      %v327 = vadd.f32 %v290, %v236
      %v328 = vadd.f32 %v294, %v236
      %v329 = vadd.f32 %v298, %v236
      %v330 = vadd.f32 %v302, %v236
      %v331 = vadd.f32 %v306, %v236
      %v332 = vadd.f32 %v310, %v236
      %v333 = vadd.f32 %v314, %v236
      %v334 = vadd.f32 %v318, %v236
      %v335 = vmax.f32 %v327, 0.0
      %v336 = vmax.f32 %v328, 0.0
      %v337 = vmax.f32 %v329, 0.0
      %v338 = vmax.f32 %v330, 0.0
      %v339 = vmax.f32 %v331, 0.0
      %v340 = vmax.f32 %v332, 0.0
      %v341 = vmax.f32 %v333, 0.0
      %v342 = vmax.f32 %v334, 0.0
      %v343 = vpack.c.bf16 %v336, %v335
      %v344 = vpack.c.bf16 %v338, %v337
      %v345 = vpack.c.bf16 %v340, %v339
      %v346 = vpack.c.bf16 %v342, %v341
      %vm347 = vcmask 523264
      %v349 = vsel %vm347, 1065369472, 0
      %351 = vmatprep.subr.bf16.mxu0 0
      %352 = vmatpush1.bf16.msra.mxu0 %v343
      %353 = vmatprep.subr.bf16.mxu0 0
      %354 = vmatpush1.bf16.msra.mxu0 %v344
      %355 = vmatprep.subr.bf16.mxu0 0
      %356 = vmatpush1.bf16.msra.mxu0 %v345
      %357 = vmatprep.subr.bf16.mxu0 0
      %358 = vmatpush1.bf16.msra.mxu0 %v346
      %359 = vmatprep.subr.bf16.mxu0 0
      %360 = vmatpush1.bf16.msra.mxu0 0
      %361 = vmatprep.subr.bf16.mxu0 0
      %362 = vmatpush1.bf16.msra.mxu0 0
      %363 = vmatprep.subr.bf16.mxu0 0
      %364 = vmatpush1.bf16.msra.mxu0 0
      %365 = vmatprep.subr.bf16.mxu0 0
      %366 = vmatpush1.bf16.msra.mxu0 0
      %367 = vmatprep.subr.bf16.mxu0 0
      %368 = vmatpush1.bf16.msra.mxu0 0
      %369 = vmatprep.subr.bf16.mxu0 0
      %370 = vmatpush1.bf16.msra.mxu0 0
      %371 = vmatprep.subr.bf16.mxu0 0
      %372 = vmatpush1.bf16.msra.mxu0 0
      %373 = vmatprep.subr.bf16.mxu0 0
      %374 = vmatpush1.bf16.msra.mxu0 0
      %375 = vmatprep.subr.bf16.mxu0 0
      %376 = vmatpush1.bf16.msra.mxu0 0
      %377 = vmatprep.subr.bf16.mxu0 0
      %378 = vmatpush1.bf16.msra.mxu0 0
      %379 = vmatprep.subr.bf16.mxu0 0
      %380 = vmatpush1.bf16.msra.mxu0 0
      %381 = vmatprep.subr.bf16.mxu0 0
      %382 = vmatpush1.bf16.msra.mxu0 0
      %383 = vmatprep.mubr.bf16.mxu0 0
      %384 = vmatmul.mubr.bf16.gmra.mrb[0].mxu0 %v349
      %v385 = vpop.f32.mrb[0].mxu0
      %v386 = vadd.f32 0.0, %v385
      %v387 = vpop.f32.mrb[0].mxu0
      %v388 = vpop.f32.mrb[0].mxu0
      %v389 = vpop.f32.mrb[0].mxu0
      %390 = vdwg.mxu0
      %391 = vst [vmem:[%s225] sm:$0xff] %v386
      %v392 = vmul.f32 %v335, %v335
      %v393 = vmul.f32 %v336, %v336
      %v394 = vmul.f32 %v337, %v337
      %v395 = vmul.f32 %v338, %v338
      %v396 = vmul.f32 %v339, %v339
      %v397 = vmul.f32 %v340, %v340
      %v398 = vmul.f32 %v341, %v341
      %v399 = vmul.f32 %v342, %v342
      %v400 = vpack.c.bf16 %v393, %v392
      %v401 = vpack.c.bf16 %v395, %v394
      %v402 = vpack.c.bf16 %v397, %v396
      %v403 = vpack.c.bf16 %v399, %v398
      %404 = vmatprep.subr.bf16.mxu0 0
      %405 = vmatpush1.bf16.msra.mxu0 %v400
      %406 = vmatprep.subr.bf16.mxu0 0
      %407 = vmatpush1.bf16.msra.mxu0 %v401
      %408 = vmatprep.subr.bf16.mxu0 0
      %409 = vmatpush1.bf16.msra.mxu0 %v402
      %410 = vmatprep.subr.bf16.mxu0 0
      %411 = vmatpush1.bf16.msra.mxu0 %v403
      %412 = vmatprep.subr.bf16.mxu0 0
      %413 = vmatpush1.bf16.msra.mxu0 0
      %414 = vmatprep.subr.bf16.mxu0 0
      %415 = vmatpush1.bf16.msra.mxu0 0
      %416 = vmatprep.subr.bf16.mxu0 0
      %417 = vmatpush1.bf16.msra.mxu0 0
      %418 = vmatprep.subr.bf16.mxu0 0
      %419 = vmatpush1.bf16.msra.mxu0 0
      %420 = vmatprep.subr.bf16.mxu0 0
      %421 = vmatpush1.bf16.msra.mxu0 0
      %422 = vmatprep.subr.bf16.mxu0 0
      %423 = vmatpush1.bf16.msra.mxu0 0
      %424 = vmatprep.subr.bf16.mxu0 0
      %425 = vmatpush1.bf16.msra.mxu0 0
      %426 = vmatprep.subr.bf16.mxu0 0
      %427 = vmatpush1.bf16.msra.mxu0 0
      %428 = vmatprep.subr.bf16.mxu0 0
      %429 = vmatpush1.bf16.msra.mxu0 0
      %430 = vmatprep.subr.bf16.mxu0 0
      %431 = vmatpush1.bf16.msra.mxu0 0
      %432 = vmatprep.subr.bf16.mxu0 0
      %433 = vmatpush1.bf16.msra.mxu0 0
      %434 = vmatprep.subr.bf16.mxu0 0
      %435 = vmatpush1.bf16.msra.mxu0 0
      %436 = vmatprep.mubr.bf16.mxu0 0
      %437 = vmatmul.mubr.bf16.gmra.mrb[0].mxu0 %v349
      %v438 = vpop.f32.mrb[0].mxu0
      %v439 = vadd.f32 0.0, %v438
      %v440 = vpop.f32.mrb[0].mxu0
      %v441 = vpop.f32.mrb[0].mxu0
      %v442 = vpop.f32.mrb[0].mxu0
      %443 = vdwg.mxu0
      %444 = vst [vmem:[%s232] sm:$0xff] %v439
      %p445 = scmp.lt.s32.totalorder %s19, 1
      %s446 = scalar_select %p445, %s19, 1
      %p447 = scmp.lt.s32.totalorder %s20, 0
      %s448 = scalar_select %p447, %s20, 0
      %s449 = sadd.s32 %s448, %s446
      %s450 = smul.addr %s449, 8
      %s451 = scalar_lea.vmem %s2, %s450
      %p452 = scmp.lt.s32.totalorder %s19, 1
      %s453 = scalar_select %p452, %s19, 1
      %p454 = scmp.lt.s32.totalorder %s20, 0
      %s455 = scalar_select %p454, %s20, 0
      %s456 = sadd.s32 %s455, %s453
      %s457 = smul.addr %s456, 8
      %s458 = scalar_lea.vmem %s3, %s457
      // Predicated region
      $region29: #{relative_attr_predictor.3} parent=27 // pred_check
        %p459 = pneg %p101
      $region30: #{relative_attr_predictor.3} parent=27 // pred_check_branch
        %461 = sbr.rel (%p459) target = $region32
      $region31: #{relative_attr_predictor.3} parent=27 // pred_region
        _
      $region32: #{relative_attr_predictor.3} parent=27 // pred_fallthru
        _
      // Predicated region
      $region33: #{relative_attr_predictor.3} parent=27 // pred_check
        %p462 = pneg %p129
      $region34: #{relative_attr_predictor.3} parent=27 // pred_check_branch
        %464 = sbr.rel (%p462) target = $region36
      $region35: #{relative_attr_predictor.3} parent=27 // pred_region
        _
      $region36: #{relative_attr_predictor.3} parent=27 // pred_fallthru
        _
    $region28: #{relative_attr_predictor.3} parent=5 // pred_fallthru
      _
    %p465 = scmp.le.s32.totalorder 2, %s10
    // Predicated region
    $region37: #{relative_attr_predictor.3} parent=5 // pred_check
      %p466 = pneg %p465
    $region38: #{relative_attr_predictor.3} parent=5 // pred_check_branch
      %468 = sbr.rel (%p466) target = $region40
    $region39: #{relative_attr_predictor.3} parent=5 // pred_region
      %s469 = ssub.s32 %s10, 2
      // Predicated region
      $region41: #{relative_attr_predictor.3} parent=39 // pred_check
        %p470 = pneg %p107
      $region42: #{relative_attr_predictor.3} parent=39 // pred_check_branch
        %472 = sbr.rel (%p470) target = $region44
      $region43: #{relative_attr_predictor.3} parent=39 // pred_region
        %p473 = scmp.lt.s32.totalorder %s21, 1
        %s474 = scalar_select %p473, %s21, 1
        %p475 = scmp.lt.s32.totalorder %s22, 0
        %s476 = scalar_select %p475, %s22, 0
        %s477 = sadd.s32 %s476, %s474
        %s478 = smul.addr %s477, 8
        %s479 = scalar_lea.vmem %s2, %s478
      $region44: #{relative_attr_predictor.3} parent=39 // pred_fallthru
        _
      // Predicated region
      $region45: #{relative_attr_predictor.3} parent=39 // pred_check
        %p480 = pneg %p135
      $region46: #{relative_attr_predictor.3} parent=39 // pred_check_branch
        %482 = sbr.rel (%p480) target = $region48
      $region47: #{relative_attr_predictor.3} parent=39 // pred_region
        %p483 = scmp.lt.s32.totalorder %s21, 1
        %s484 = scalar_select %p483, %s21, 1
        %p485 = scmp.lt.s32.totalorder %s22, 0
        %s486 = scalar_select %p485, %s22, 0
        %s487 = sadd.s32 %s486, %s484
        %s488 = smul.addr %s487, 8
        %s489 = scalar_lea.vmem %s3, %s488
      $region48: #{relative_attr_predictor.3} parent=39 // pred_fallthru
        _
    $region40: #{relative_attr_predictor.3} parent=5 // pred_fallthru
      _
  $region6: #{relative_attr_predictor.3} parent=0 // loop_footer
    %s14 = sadd.s32 1, %s10
  $region7: #{relative_attr_predictor.3} parent=0 // loop_footer_branch
    %9 = sbr.rel target = $region3
  $region8: #{relative_attr_predictor.3} parent=0 // loop_exit
    _

// kernel: relative_attr_predictor.5
$region0: #{relative_attr_predictor.5}
  #allocation0 [shape = 'u32[]', space=smem, size = 0x4, offset = 0x4, fixed_abs, tag = 'smem constant byte address 0x4 - core index']
  #allocation1 [shape = 'u32[144,128]{1,0:T(1,128)}', space=vmem, size = 0x12000, scoped, tag = 'internal scratch']
  %s0 = inlined_call_operand.vmem [shape: f32[2,8,128], index: 0, kind: input, shape index: {}]
  %s1 = inlined_call_operand.vmem [shape: f32[2,8,128], index: 1, kind: input, shape index: {}]
  %s2 = inlined_call_operand.vmem [shape: bf16[128,128], index: 2, kind: input, shape index: {}]
  %s3 = inlined_call_operand.vmem [shape: f32[1,128], index: 3, kind: input, shape index: {}]
  %s4 = inlined_call_operand.vmem [shape: bf16[128,10], index: 4, kind: input, shape index: {}]
  %s5 = inlined_call_operand.vmem [shape: f32[1,10], index: 5, kind: input, shape index: {}]
  %s6 = inlined_call_operand.hbm [shape: f32[2,64,10], index: 6, kind: output, shape index: {}]
  %s7 = sld [smem:[#allocation0]]
  $region57: #{relative_attr_predictor.5} parent=0
    _
  %s9 = ssub.s32 1, %s7
  %s10 = scalar_select 0, %s9, %s7
  $region1: #{relative_attr_predictor.5} parent=0
    #allocation2 [shape = 'u8[65536]{0}', space=vmem, size = 0x10000, scoped, tag = 'output window, operand 0']
    #allocation3 [shape = 's32[2]{0}', space=sflag, size = 0x8, scoped, tag = 'scoped memory for relative_attr_predictor.5']
    %11 = vsyncpa [#allocation3], 0
    %s12 = scalar_lea.sflag [#allocation3], 1
    %13 = vsyncpa %s12, 0
    loop: start=0, step=1, limit=4
    $region2: #{relative_attr_predictor.5} parent=1 // loop_pre_header
      _
    $region3: #{relative_attr_predictor.5} parent=1 // loop_header
      %s15 = sphi 0, %s19
      %p16 = scmp.ge.s32.totalorder %s15, 4
      %s22 = sphi 0, %s34
      %s23 = sphi 0, %s30
      %s24 = sphi 0, %s22
      %s25 = sphi 0, %s23
      %s26 = sphi 0, %s24
      %s27 = sphi 0, %s25
      %s39 = sphi 0, %s41
      %s42 = sphi 0, %s39
      %s43 = sphi 0, %s42
      %s59 = sphi 0, %s43
      %s65 = sphi 0, %s67
      %s68 = sphi 0, %s65
      %s69 = sphi 0, %s68
      %s85 = sphi 0, %s69
      %s89 = sphi 0, %s89
      %s91 = sphi 0, %s89
      %s92 = sphi 0, %s91
      %s106 = sphi 0, %s92
      %s110 = sphi 0, %s110
      %s112 = sphi 0, %s110
      %s113 = sphi 0, %s112
      %s127 = sphi 0, %s113
      %s131 = sphi 0, %s131
      %s133 = sphi 0, %s131
      %s134 = sphi 0, %s133
      %s148 = sphi 0, %s134
      %s152 = sphi 0, %s152
      %s154 = sphi 0, %s152
      %s155 = sphi 0, %s154
      %s169 = sphi 0, %s155
      %s177 = sphi 0, %s179
      %s180 = sphi 0, %s177
      %s181 = sphi 0, %s180
      %s197 = sphi 0, %s181
    $region4: #{relative_attr_predictor.5} parent=1 // loop_header_branch
      %18 = sbr.rel (%p16) target = $region8
    $region5: #{relative_attr_predictor.5} parent=1 // loop_body
      %s20 = ssub.s32 %s15, 1
      %s21 = ssub.s32 %s15, 2
      %s28 = sadd.s32 1, %s23
      %p29 = scmp.ge.s32.totalorder %s28, 1
      %s30 = scalar_select %p29, 0, %s28
      %s31 = sadd.s32 1, %s22
      %s32 = scalar_select %p29, %s31, %s22
      %p33 = scmp.ge.s32.totalorder %s32, 2
      %s34 = scalar_select %p33, 0, %s32
      %s35 = ssub.s32 %s22, %s34
      %s36 = ssub.s32 %s23, %s30
      %s37 = sor.u32 %s35, %s36
      %p38 = scmp.eq.s32.totalorder %s37, 0
      %s40 = sadd.s32 %s39, 1
      %s41 = scalar_select %p38, %s39, %s40
      %p44 = pneg %p38
      %p45 = scmp.eq.s32.totalorder %s15, 1
      %p46 = por %p44, %p45
      %p47 = scmp.ne.s32.totalorder %s39, %s42
      %p48 = scmp.eq.s32.totalorder %s15, 0
      %p49 = por %p47, %p48
      %p50 = scmp.ne.s32.totalorder %s39, %s42
      %p51 = scmp.eq.s32.totalorder %s20, 1
      %p52 = por %p50, %p51
      %p53 = scmp.ne.s32.totalorder %s42, %s43
      %p54 = scmp.eq.s32.totalorder %s20, 0
      %p55 = por %p53, %p54
      %p56 = scmp.ne.s32.totalorder %s42, %s43
      %p57 = scmp.eq.s32.totalorder %s21, 1
      %p58 = por %p56, %p57
      %p60 = scmp.ne.s32.totalorder %s43, %s59
      %p61 = scmp.eq.s32.totalorder %s21, 0
      %p62 = por %p60, %p61
      %s63 = ssub.s32 %s22, %s34
      %p64 = scmp.eq.s32.totalorder %s63, 0
      %s66 = sadd.s32 %s65, 1
      %s67 = scalar_select %p64, %s65, %s66
      %p70 = pneg %p64
      %p71 = scmp.eq.s32.totalorder %s15, 1
      %p72 = por %p70, %p71
      %p73 = scmp.ne.s32.totalorder %s65, %s68
      %p74 = scmp.eq.s32.totalorder %s15, 0
      %p75 = por %p73, %p74
      %p76 = scmp.ne.s32.totalorder %s65, %s68
      %p77 = scmp.eq.s32.totalorder %s20, 1
      %p78 = por %p76, %p77
      %p79 = scmp.ne.s32.totalorder %s68, %s69
      %p80 = scmp.eq.s32.totalorder %s20, 0
      %p81 = por %p79, %p80
      %p82 = scmp.ne.s32.totalorder %s68, %s69
      %p83 = scmp.eq.s32.totalorder %s21, 1
      %p84 = por %p82, %p83
      %p86 = scmp.ne.s32.totalorder %s69, %s85
      %p87 = scmp.eq.s32.totalorder %s21, 0
      %p88 = por %p86, %p87
      %s90 = sadd.s32 %s89, 1
      %p93 = scmp.eq.s32.totalorder %s15, 1
      %p94 = scmp.ne.s32.totalorder %s89, %s91
      %p95 = scmp.eq.s32.totalorder %s15, 0
      %p96 = por %p94, %p95
      %p97 = scmp.ne.s32.totalorder %s89, %s91
      %p98 = scmp.eq.s32.totalorder %s20, 1
      %p99 = por %p97, %p98
      %p100 = scmp.ne.s32.totalorder %s91, %s92
      %p101 = scmp.eq.s32.totalorder %s20, 0
      %p102 = por %p100, %p101
      %p103 = scmp.ne.s32.totalorder %s91, %s92
      %p104 = scmp.eq.s32.totalorder %s21, 1
      %p105 = por %p103, %p104
      %p107 = scmp.ne.s32.totalorder %s92, %s106
      %p108 = scmp.eq.s32.totalorder %s21, 0
      %p109 = por %p107, %p108
      %s111 = sadd.s32 %s110, 1
      %p114 = scmp.eq.s32.totalorder %s15, 1
      %p115 = scmp.ne.s32.totalorder %s110, %s112
      %p116 = scmp.eq.s32.totalorder %s15, 0
      %p117 = por %p115, %p116
      %p118 = scmp.ne.s32.totalorder %s110, %s112
      %p119 = scmp.eq.s32.totalorder %s20, 1
      %p120 = por %p118, %p119
      %p121 = scmp.ne.s32.totalorder %s112, %s113
      %p122 = scmp.eq.s32.totalorder %s20, 0
      %p123 = por %p121, %p122
      %p124 = scmp.ne.s32.totalorder %s112, %s113
      %p125 = scmp.eq.s32.totalorder %s21, 1
      %p126 = por %p124, %p125
      %p128 = scmp.ne.s32.totalorder %s113, %s127
      %p129 = scmp.eq.s32.totalorder %s21, 0
      %p130 = por %p128, %p129
      %s132 = sadd.s32 %s131, 1
      %p135 = scmp.eq.s32.totalorder %s15, 1
      %p136 = scmp.ne.s32.totalorder %s131, %s133
      %p137 = scmp.eq.s32.totalorder %s15, 0
      %p138 = por %p136, %p137
      %p139 = scmp.ne.s32.totalorder %s131, %s133
      %p140 = scmp.eq.s32.totalorder %s20, 1
      %p141 = por %p139, %p140
      %p142 = scmp.ne.s32.totalorder %s133, %s134
      %p143 = scmp.eq.s32.totalorder %s20, 0
      %p144 = por %p142, %p143
      %p145 = scmp.ne.s32.totalorder %s133, %s134
      %p146 = scmp.eq.s32.totalorder %s21, 1
      %p147 = por %p145, %p146
      %p149 = scmp.ne.s32.totalorder %s134, %s148
      %p150 = scmp.eq.s32.totalorder %s21, 0
      %p151 = por %p149, %p150
      %s153 = sadd.s32 %s152, 1
      %p156 = scmp.eq.s32.totalorder %s15, 1
      %p157 = scmp.ne.s32.totalorder %s152, %s154
      %p158 = scmp.eq.s32.totalorder %s15, 0
      %p159 = por %p157, %p158
      %p160 = scmp.ne.s32.totalorder %s152, %s154
      %p161 = scmp.eq.s32.totalorder %s20, 1
      %p162 = por %p160, %p161
      %p163 = scmp.ne.s32.totalorder %s154, %s155
      %p164 = scmp.eq.s32.totalorder %s20, 0
      %p165 = por %p163, %p164
      %p166 = scmp.ne.s32.totalorder %s154, %s155
      %p167 = scmp.eq.s32.totalorder %s21, 1
      %p168 = por %p166, %p167
      %p170 = scmp.ne.s32.totalorder %s155, %s169
      %p171 = scmp.eq.s32.totalorder %s21, 0
      %p172 = por %p170, %p171
      %s173 = ssub.s32 %s22, %s34
      %s174 = ssub.s32 %s23, %s30
      %s175 = sor.u32 %s173, %s174
      %p176 = scmp.eq.s32.totalorder %s175, 0
      %s178 = sadd.s32 %s177, 1
      %s179 = scalar_select %p176, %s177, %s178
      %p182 = pneg %p176
      %p183 = scmp.eq.s32.totalorder %s15, 1
      %p184 = por %p182, %p183
      %p185 = scmp.ne.s32.totalorder %s177, %s180
      %p186 = scmp.eq.s32.totalorder %s15, 0
      %p187 = por %p185, %p186
      %p188 = scmp.ne.s32.totalorder %s177, %s180
      %p189 = scmp.eq.s32.totalorder %s20, 1
      %p190 = por %p188, %p189
      %p191 = scmp.ne.s32.totalorder %s180, %s181
      %p192 = scmp.eq.s32.totalorder %s20, 0
      %p193 = por %p191, %p192
      %p194 = scmp.ne.s32.totalorder %s180, %s181
      %p195 = scmp.eq.s32.totalorder %s21, 1
      %p196 = por %p194, %p195
      %p198 = scmp.ne.s32.totalorder %s181, %s197
      %p199 = scmp.eq.s32.totalorder %s21, 0
      %p200 = por %p198, %p199
      %p201 = scmp.le.s32.totalorder 1, %s15
      %p202 = scmp.lt.s32.totalorder %s15, 3
      %p203 = pnand %p201, %p202
      %p204 = pneg %p203
      // Predicated region
      $region9: #{relative_attr_predictor.5} parent=5 // pred_check
        _
      $region10: #{relative_attr_predictor.5} parent=5 // pred_check_branch
        %206 = sbr.rel (%p203) target = $region12
      $region11: #{relative_attr_predictor.5} parent=5 // pred_region
        %s207 = ssub.s32 %s15, 1
        // Predicated region
        $region13: #{relative_attr_predictor.5} parent=11 // pred_check
          %p208 = pneg %p102
        $region14: #{relative_attr_predictor.5} parent=11 // pred_check_branch
          %210 = sbr.rel (%p208) target = $region16
        $region15: #{relative_attr_predictor.5} parent=11 // pred_region
          _
        $region16: #{relative_attr_predictor.5} parent=11 // pred_fallthru
          _
        // Predicated region
        $region17: #{relative_attr_predictor.5} parent=11 // pred_check
          %p211 = pneg %p123
        $region18: #{relative_attr_predictor.5} parent=11 // pred_check_branch
          %213 = sbr.rel (%p211) target = $region20
        $region19: #{relative_attr_predictor.5} parent=11 // pred_region
          _
        $region20: #{relative_attr_predictor.5} parent=11 // pred_fallthru
          _
        // Predicated region
        $region21: #{relative_attr_predictor.5} parent=11 // pred_check
          %p214 = pneg %p144
        $region22: #{relative_attr_predictor.5} parent=11 // pred_check_branch
          %216 = sbr.rel (%p214) target = $region24
        $region23: #{relative_attr_predictor.5} parent=11 // pred_region
          _
        $region24: #{relative_attr_predictor.5} parent=11 // pred_fallthru
          _
        // Predicated region
        $region25: #{relative_attr_predictor.5} parent=11 // pred_check
          %p217 = pneg %p165
        $region26: #{relative_attr_predictor.5} parent=11 // pred_check_branch
          %219 = sbr.rel (%p217) target = $region28
        $region27: #{relative_attr_predictor.5} parent=11 // pred_region
          _
        $region28: #{relative_attr_predictor.5} parent=11 // pred_fallthru
          _
      $region12: #{relative_attr_predictor.5} parent=5 // pred_fallthru
        _
      %p220 = scmp.lt.s32.totalorder %s15, 2
      // Predicated region
      $region29: #{relative_attr_predictor.5} parent=5 // pred_check
        %p221 = pneg %p220
      $region30: #{relative_attr_predictor.5} parent=5 // pred_check_branch
        %223 = sbr.rel (%p221) target = $region32
      $region31: #{relative_attr_predictor.5} parent=5 // pred_region
        // Predicated region
        $region33: #{relative_attr_predictor.5} parent=31 // pred_check
          %p224 = pneg %p49
        $region34: #{relative_attr_predictor.5} parent=31 // pred_check_branch
          %226 = sbr.rel (%p224) target = $region36
        $region35: #{relative_attr_predictor.5} parent=31 // pred_region
          %p227 = scmp.lt.s32.totalorder %s22, 1
          %s228 = scalar_select %p227, %s22, 1
          %p229 = scmp.lt.s32.totalorder %s23, 0
          %s230 = scalar_select %p229, %s23, 0
          %s231 = sadd.s32 %s230, %s228
          %s232 = smul.addr %s231, 8
          %s233 = scalar_lea.vmem %s0, %s232
        $region36: #{relative_attr_predictor.5} parent=31 // pred_fallthru
          _
        // Predicated region
        $region37: #{relative_attr_predictor.5} parent=31 // pred_check
          %p234 = pneg %p75
        $region38: #{relative_attr_predictor.5} parent=31 // pred_check_branch
          %236 = sbr.rel (%p234) target = $region40
        $region39: #{relative_attr_predictor.5} parent=31 // pred_region
          %p237 = scmp.lt.s32.totalorder %s22, 1
          %s238 = scalar_select %p237, %s22, 1
          %s239 = smul.addr %s238, 8
          %s240 = scalar_lea.vmem %s1, %s239
        $region40: #{relative_attr_predictor.5} parent=31 // pred_fallthru
          _
      $region32: #{relative_attr_predictor.5} parent=5 // pred_fallthru
        _
      %p241 = scmp.le.s32.totalorder 1, %s15
      %p242 = scmp.lt.s32.totalorder %s15, 3
      %p243 = pnand %p241, %p242
      %p244 = pneg %p243
      // Predicated region
      $region41: #{relative_attr_predictor.5} parent=5 // pred_check
        _
      $region42: #{relative_attr_predictor.5} parent=5 // pred_check_branch
        %246 = sbr.rel (%p243) target = $region44
      $region43: #{relative_attr_predictor.5} parent=5 // pred_region
        %s247 = ssub.s32 %s15, 1
        %p248 = scmp.lt.s32.totalorder %s24, 1
        %s249 = scalar_select %p248, %s24, 1
        %p250 = scmp.lt.s32.totalorder %s25, 0
        %s251 = scalar_select %p250, %s25, 0
        %s252 = sadd.s32 %s251, %s249
        %s253 = smul.addr %s252, 8
        %s254 = scalar_lea.vmem %s0, %s253
        %p255 = pneg %p55
        %p256 = pneg %p52
        %p257 = scmp.lt.s32.totalorder %s24, 1
        %s258 = scalar_select %p257, %s24, 1
        %s259 = smul.addr %s258, 8
        %s260 = scalar_lea.vmem %s1, %s259
        %p261 = pneg %p81
        %p262 = pneg %p78
        %p263 = pneg %p102
        %p264 = pneg %p99
        %p265 = pneg %p123
        %p266 = pneg %p120
        %p267 = pneg %p144
        %p268 = pneg %p141
        %p269 = pneg %p165
        %p270 = pneg %p162
        %p271 = pneg %p193
        %p272 = pneg %p190
        %s273 = sand.u32 %s180, 1
        %s274 = scalar_lea.sflag [#allocation3], %s273
        %s275 = sand.u32 %s180, 1
        %s276 = smul.addr %s275, 64
        %s277 = scalar_lea.vmem [#allocation2], %s276
        %p278 = scmp.lt.s32.totalorder %s24, 1
        %s279 = scalar_select %p278, %s24, 1
        %p280 = scmp.lt.s32.totalorder %s25, 0
        %s281 = scalar_select %p280, %s25, 0
        %s282 = sadd.s32 %s281, %s279
        %s283 = smul.addr %s282, 8
        %s284 = scalar_lea.vmem %s0, %s283
        %p285 = scmp.lt.s32.totalorder %s24, 1
        %s286 = scalar_select %p285, %s24, 1
        %s287 = smul.addr %s286, 8
        %s288 = scalar_lea.vmem %s1, %s287
        %s289 = smul.u32 8, %s25
        %v291 = vld [vmem:[%s284] sm:$0xff]
        %v292 = vld [vmem:[%s288] sm:$0xff]
        %v294 = vcombine.high %v291, %v291
        %v296 = vunpack.c.l.s4 1966171168
        %v297 = vunpack.c.0.s8 %v296
        %v298 = vlaneseq
        %v299 = vshrl.u32 %v298, 7
        %v300 = vsub.s32 %v297, %v299
        %v301 = vrot.slane %v291, %v300
        %v303 = vunpack.c.l.s4 1966171168
        %v304 = vunpack.c.0.s8 %v303
        %v305 = vlaneseq
        %v306 = vshrl.u32 %v305, 7
        %v307 = vsub.s32 %v304, %v306
        %v308 = vrot.slane %v294, %v307
        %v309 = vcombine.high %v301, %v301
        %v310 = vcombine.high %v308, %v308
        %v312 = vunpack.c.l.s4 1966171168
        %v313 = vunpack.c.0.s8 %v312
        %v314 = vlaneseq
        %v315 = vshrl.u32 %v314, 7
        %v316 = vsub.s32 %v313, %v315
        %v317 = vrot.slane %v301, %v316
        %v319 = vunpack.c.l.s4 1966171168
        %v320 = vunpack.c.0.s8 %v319
        %v321 = vlaneseq
        %v322 = vshrl.u32 %v321, 7
        %v323 = vsub.s32 %v320, %v322
        %v324 = vrot.slane %v308, %v323
        %v326 = vunpack.c.l.s4 1966171168
        %v327 = vunpack.c.0.s8 %v326
        %v328 = vlaneseq
        %v329 = vshrl.u32 %v328, 7
        %v330 = vsub.s32 %v327, %v329
        %v331 = vrot.slane %v309, %v330
        %v333 = vunpack.c.l.s4 1966171168
        %v334 = vunpack.c.0.s8 %v333
        %v335 = vlaneseq
        %v336 = vshrl.u32 %v335, 7
        %v337 = vsub.s32 %v334, %v336
        %v338 = vrot.slane %v310, %v337
        %v339 = vcombine.high %v317, %v317
        %v340 = vcombine.high %v324, %v324
        %v341 = vcombine.high %v331, %v331
        %v342 = vcombine.high %v338, %v338
        %v343 = vlaneseq
        %v344 = vshrl.u32 %v343, 7
        %v345 = vsub.s32 0, %v344
        %v346 = vrot.slane %v317, %v345
        %v347 = vlaneseq
        %v348 = vshrl.u32 %v347, 7
        %v349 = vsub.s32 0, %v348
        %v350 = vrot.slane %v331, %v349
        %v351 = vlaneseq
        %v352 = vshrl.u32 %v351, 7
        %v353 = vsub.s32 0, %v352
        %v354 = vrot.slane %v339, %v353
        %v355 = vlaneseq
        %v356 = vshrl.u32 %v355, 7
        %v357 = vsub.s32 0, %v356
        %v358 = vrot.slane %v341, %v357
        %v359 = vlaneseq
        %v360 = vshrl.u32 %v359, 7
        %v361 = vsub.s32 0, %v360
        %v362 = vrot.slane %v324, %v361
        %v363 = vlaneseq
        %v364 = vshrl.u32 %v363, 7
        %v365 = vsub.s32 0, %v364
        %v366 = vrot.slane %v338, %v365
        %v367 = vlaneseq
        %v368 = vshrl.u32 %v367, 7
        %v369 = vsub.s32 0, %v368
        %v370 = vrot.slane %v340, %v369
        %v371 = vlaneseq
        %v372 = vshrl.u32 %v371, 7
        %v373 = vsub.s32 0, %v372
        %v374 = vrot.slane %v342, %v373
        %v383 = vadd.f32 %v346, %v292
        %v384 = vadd.f32 %v350, %v292
        %v385 = vadd.f32 %v354, %v292
        %v386 = vadd.f32 %v358, %v292
        %v387 = vadd.f32 %v362, %v292
        %v388 = vadd.f32 %v366, %v292
        %v389 = vadd.f32 %v370, %v292
        %v390 = vadd.f32 %v374, %v292
        %v391 = vmax.f32 %v383, 0.0
        %v392 = vmax.f32 %v384, 0.0
        %v393 = vmax.f32 %v385, 0.0
        %v394 = vmax.f32 %v386, 0.0
        %v395 = vmax.f32 %v387, 0.0
        %v396 = vmax.f32 %v388, 0.0
        %v397 = vmax.f32 %v389, 0.0
        %v398 = vmax.f32 %v390, 0.0
        %v399 = vpack.c.bf16 %v392, %v391
        %v400 = vpack.c.bf16 %v394, %v393
        %v401 = vpack.c.bf16 %v396, %v395
        %v402 = vpack.c.bf16 %v398, %v397
        %v403 = vld [vmem:[%s2] sm:$0xf]
        %v404 = vld [vmem:[%s2 + $0x4] sm:$0xf]
        %v405 = vld [vmem:[%s2 + $0x8] sm:$0xf]
        %v406 = vld [vmem:[%s2 + $0xc] sm:$0xf]
        %v407 = vld [vmem:[%s2 + $0x10] sm:$0xf]
        %v408 = vld [vmem:[%s2 + $0x14] sm:$0xf]
        %v409 = vld [vmem:[%s2 + $0x18] sm:$0xf]
        %v410 = vld [vmem:[%s2 + $0x1c] sm:$0xf]
        %v411 = vld [vmem:[%s2 + $0x20] sm:$0xf]
        %v412 = vld [vmem:[%s2 + $0x24] sm:$0xf]
        %v413 = vld [vmem:[%s2 + $0x28] sm:$0xf]
        %v414 = vld [vmem:[%s2 + $0x2c] sm:$0xf]
        %v415 = vld [vmem:[%s2 + $0x30] sm:$0xf]
        %v416 = vld [vmem:[%s2 + $0x34] sm:$0xf]
        %v417 = vld [vmem:[%s2 + $0x38] sm:$0xf]
        %v418 = vld [vmem:[%s2 + $0x3c] sm:$0xf]
        %v419 = vld [vmem:[%s3] sm:$0x1]
        %v421 = vlaneseq
        %v422 = vshrl.u32 %v421, 7
        %v423 = vsub.s32 0, %v422
        %v424 = vrot.slane %v419, %v423
        %v442 = vunpack.c.l.b16 %v403
        %v443 = vunpack.c.l.b16 %v404
        %v444 = vunpack.c.l.b16 %v405
        %v445 = vunpack.c.l.b16 %v406
        %v446 = vunpack.c.l.b16 %v407
        %v447 = vunpack.c.l.b16 %v408
        %v448 = vunpack.c.l.b16 %v409
        %v449 = vunpack.c.l.b16 %v410
        %v450 = vunpack.c.l.b16 %v411
        %v451 = vunpack.c.l.b16 %v412
        %v452 = vunpack.c.l.b16 %v413
        %v453 = vunpack.c.l.b16 %v414
        %v454 = vunpack.c.l.b16 %v415
        %v455 = vunpack.c.l.b16 %v416
        %v456 = vunpack.c.l.b16 %v417
        %v457 = vunpack.c.l.b16 %v418
        %v458 = vpack.c.b16 %v443, %v442
        %v459 = vpack.c.b16 %v445, %v444
        %v460 = vpack.c.b16 %v447, %v446
        %v461 = vpack.c.b16 %v449, %v448
        %v462 = vpack.c.b16 %v451, %v450
        %v463 = vpack.c.b16 %v453, %v452
        %v464 = vpack.c.b16 %v455, %v454
        %v465 = vpack.c.b16 %v457, %v456
        %474 = vmatprep.subr.bf16.mxu0 0
        %475 = vmatpush1.bf16.msra.mxu0 %v458
        %476 = vmatprep.subr.bf16.mxu0 0
        %477 = vmatpush1.bf16.msra.mxu0 %v459
        %478 = vmatprep.subr.bf16.mxu0 0
        %479 = vmatpush1.bf16.msra.mxu0 %v460
        %480 = vmatprep.subr.bf16.mxu0 0
        %481 = vmatpush1.bf16.msra.mxu0 %v461
        %482 = vmatprep.subr.bf16.mxu0 0
        %483 = vmatpush1.bf16.msra.mxu0 %v462
        %484 = vmatprep.subr.bf16.mxu0 0
        %485 = vmatpush1.bf16.msra.mxu0 %v463
        %486 = vmatprep.subr.bf16.mxu0 0
        %487 = vmatpush1.bf16.msra.mxu0 %v464
        %488 = vmatprep.subr.bf16.mxu0 0
        %489 = vmatpush1.bf16.msra.mxu0 %v465
        %490 = vmatprep.subr.bf16.mxu0 0
        %491 = vmatpush1.bf16.msra.mxu0 0
        %492 = vmatprep.subr.bf16.mxu0 0
        %493 = vmatpush1.bf16.msra.mxu0 0
        %494 = vmatprep.subr.bf16.mxu0 0
        %495 = vmatpush1.bf16.msra.mxu0 0
        %496 = vmatprep.subr.bf16.mxu0 0
        %497 = vmatpush1.bf16.msra.mxu0 0
        %498 = vmatprep.subr.bf16.mxu0 0
        %499 = vmatpush1.bf16.msra.mxu0 0
        %500 = vmatprep.subr.bf16.mxu0 0
        %501 = vmatpush1.bf16.msra.mxu0 0
        %502 = vmatprep.subr.bf16.mxu0 0
        %503 = vmatpush1.bf16.msra.mxu0 0
        %504 = vmatprep.subr.bf16.mxu0 0
        %505 = vmatpush1.bf16.msra.mxu0 0
        %506 = vmatprep.mubr.bf16.mxu0 0
        %507 = vmatmul.mubr.bf16.gmra.mrb[0].mxu0 %v399
        %v508 = vpop.f32.mrb[0].mxu0
        %v509 = vadd.f32 %v424, %v508
        %v510 = vpop.f32.mrb[0].mxu0
        %v511 = vpop.f32.mrb[0].mxu0
        %v512 = vadd.f32 %v424, %v511
        %v513 = vpop.f32.mrb[0].mxu0
        %514 = vmatprep.mubr.bf16.mxu0 0
        %515 = vmatmul.mubr.bf16.gmra.mrb[0].mxu0 %v400
        %v516 = vpop.f32.mrb[0].mxu0
        %v517 = vadd.f32 %v424, %v516
        %v518 = vpop.f32.mrb[0].mxu0
        %v519 = vpop.f32.mrb[0].mxu0
        %v520 = vadd.f32 %v424, %v519
        %v521 = vpop.f32.mrb[0].mxu0
        %522 = vmatprep.mubr.bf16.mxu0 0
        %523 = vmatmul.mubr.bf16.gmra.mrb[0].mxu0 %v401
        %v524 = vpop.f32.mrb[0].mxu0
        %v525 = vadd.f32 %v424, %v524
        %v526 = vpop.f32.mrb[0].mxu0
        %v527 = vpop.f32.mrb[0].mxu0
        %v528 = vadd.f32 %v424, %v527
        %v529 = vpop.f32.mrb[0].mxu0
        %530 = vmatprep.mubr.bf16.mxu0 0
        %531 = vmatmul.mubr.bf16.gmra.mrb[0].mxu0 %v402
        %v532 = vpop.f32.mrb[0].mxu0
        %v533 = vadd.f32 %v424, %v532
        %v534 = vpop.f32.mrb[0].mxu0
        %v535 = vpop.f32.mrb[0].mxu0
        %v536 = vadd.f32 %v424, %v535
        %v537 = vpop.f32.mrb[0].mxu0
        %538 = vdwg.mxu0
        %v539 = vmax.f32 %v509, 0.0
        %v540 = vmax.f32 %v512, 0.0
        %v541 = vmax.f32 %v517, 0.0
        %v542 = vmax.f32 %v520, 0.0
        %v543 = vmax.f32 %v525, 0.0
        %v544 = vmax.f32 %v528, 0.0
        %v545 = vmax.f32 %v533, 0.0
        %v546 = vmax.f32 %v536, 0.0
        %v547 = vpack.c.bf16 %v540, %v539
        %v548 = vpack.c.bf16 %v542, %v541
        %v549 = vpack.c.bf16 %v544, %v543
        %v550 = vpack.c.bf16 %v546, %v545
        %v551 = vld [vmem:[%s4] sm:$0xf]
        %v552 = vld [vmem:[%s4 + $0x4] sm:$0xf]
        %v553 = vld [vmem:[%s4 + $0x8] sm:$0xf]
        %v554 = vld [vmem:[%s4 + $0xc] sm:$0xf]
        %v555 = vld [vmem:[%s4 + $0x10] sm:$0xf]
        %v556 = vld [vmem:[%s4 + $0x14] sm:$0xf]
        %v557 = vld [vmem:[%s4 + $0x18] sm:$0xf]
        %v558 = vld [vmem:[%s4 + $0x1c] sm:$0xf]
        %v559 = vld [vmem:[%s4 + $0x20] sm:$0xf]
        %v560 = vld [vmem:[%s4 + $0x24] sm:$0xf]
        %v561 = vld [vmem:[%s4 + $0x28] sm:$0xf]
        %v562 = vld [vmem:[%s4 + $0x2c] sm:$0xf]
        %v563 = vld [vmem:[%s4 + $0x30] sm:$0xf]
        %v564 = vld [vmem:[%s4 + $0x34] sm:$0xf]
        %v565 = vld [vmem:[%s4 + $0x38] sm:$0xf]
        %v566 = vld [vmem:[%s4 + $0x3c] sm:$0xf]
        %v567 = vld [vmem:[%s5] sm:$0x1]
        %v569 = vlaneseq
        %v570 = vshrl.u32 %v569, 7
        %v571 = vsub.s32 0, %v570
        %v572 = vrot.slane %v567, %v571
        %v590 = vunpack.c.l.b16 %v551
        %v591 = vunpack.c.l.b16 %v552
        %v592 = vunpack.c.l.b16 %v553
        %v593 = vunpack.c.l.b16 %v554
        %v594 = vunpack.c.l.b16 %v555
        %v595 = vunpack.c.l.b16 %v556
        %v596 = vunpack.c.l.b16 %v557
        %v597 = vunpack.c.l.b16 %v558
        %v598 = vunpack.c.l.b16 %v559
        %v599 = vunpack.c.l.b16 %v560
        %v600 = vunpack.c.l.b16 %v561
        %v601 = vunpack.c.l.b16 %v562
        %v602 = vunpack.c.l.b16 %v563
        %v603 = vunpack.c.l.b16 %v564
        %v604 = vunpack.c.l.b16 %v565
        %v605 = vunpack.c.l.b16 %v566
        %v606 = vpack.c.b16 %v591, %v590
        %v607 = vpack.c.b16 %v593, %v592
        %v608 = vpack.c.b16 %v595, %v594
        %v609 = vpack.c.b16 %v597, %v596
        %v610 = vpack.c.b16 %v599, %v598
        %v611 = vpack.c.b16 %v601, %v600
        %v612 = vpack.c.b16 %v603, %v602
        %v613 = vpack.c.b16 %v605, %v604
        %622 = vmatprep.subr.bf16.mxu0 0
        %623 = vmatpush1.bf16.msra.mxu0 %v606
        %624 = vmatprep.subr.bf16.mxu0 0
        %625 = vmatpush1.bf16.msra.mxu0 %v607
        %626 = vmatprep.subr.bf16.mxu0 0
        %627 = vmatpush1.bf16.msra.mxu0 %v608
        %628 = vmatprep.subr.bf16.mxu0 0
        %629 = vmatpush1.bf16.msra.mxu0 %v609
        %630 = vmatprep.subr.bf16.mxu0 0
        %631 = vmatpush1.bf16.msra.mxu0 %v610
        %632 = vmatprep.subr.bf16.mxu0 0
        %633 = vmatpush1.bf16.msra.mxu0 %v611
        %634 = vmatprep.subr.bf16.mxu0 0
        %635 = vmatpush1.bf16.msra.mxu0 %v612
        %636 = vmatprep.subr.bf16.mxu0 0
        %637 = vmatpush1.bf16.msra.mxu0 %v613
        %638 = vmatprep.subr.bf16.mxu0 0
        %639 = vmatpush1.bf16.msra.mxu0 0
        %640 = vmatprep.subr.bf16.mxu0 0
        %641 = vmatpush1.bf16.msra.mxu0 0
        %642 = vmatprep.subr.bf16.mxu0 0
        %643 = vmatpush1.bf16.msra.mxu0 0
        %644 = vmatprep.subr.bf16.mxu0 0
        %645 = vmatpush1.bf16.msra.mxu0 0
        %646 = vmatprep.subr.bf16.mxu0 0
        %647 = vmatpush1.bf16.msra.mxu0 0
        %648 = vmatprep.subr.bf16.mxu0 0
        %649 = vmatpush1.bf16.msra.mxu0 0
        %650 = vmatprep.subr.bf16.mxu0 0
        %651 = vmatpush1.bf16.msra.mxu0 0
        %652 = vmatprep.subr.bf16.mxu0 0
        %653 = vmatpush1.bf16.msra.mxu0 0
        %654 = vmatprep.mubr.bf16.mxu0 0
        %655 = vmatmul.mubr.bf16.gmra.mrb[0].mxu0 %v547
        %v656 = vpop.f32.mrb[0].mxu0
        %v657 = vadd.f32 %v572, %v656
        %v658 = vpop.f32.mrb[0].mxu0
        %v659 = vpop.f32.mrb[0].mxu0
        %v660 = vadd.f32 %v572, %v659
        %v661 = vpop.f32.mrb[0].mxu0
        %662 = vmatprep.mubr.bf16.mxu0 0
        %663 = vmatmul.mubr.bf16.gmra.mrb[0].mxu0 %v548
        %v664 = vpop.f32.mrb[0].mxu0
        %v665 = vadd.f32 %v572, %v664
        %v666 = vpop.f32.mrb[0].mxu0
        %v667 = vpop.f32.mrb[0].mxu0
        %v668 = vadd.f32 %v572, %v667
        %v669 = vpop.f32.mrb[0].mxu0
        %670 = vmatprep.mubr.bf16.mxu0 0
        %671 = vmatmul.mubr.bf16.gmra.mrb[0].mxu0 %v549
        %v672 = vpop.f32.mrb[0].mxu0
        %v673 = vadd.f32 %v572, %v672
        %v674 = vpop.f32.mrb[0].mxu0
        %v675 = vpop.f32.mrb[0].mxu0
        %v676 = vadd.f32 %v572, %v675
        %v677 = vpop.f32.mrb[0].mxu0
        %678 = vmatprep.mubr.bf16.mxu0 0
        %679 = vmatmul.mubr.bf16.gmra.mrb[0].mxu0 %v550
        %v680 = vpop.f32.mrb[0].mxu0
        %v681 = vadd.f32 %v572, %v680
        %v682 = vpop.f32.mrb[0].mxu0
        %v683 = vpop.f32.mrb[0].mxu0
        %v684 = vadd.f32 %v572, %v683
        %v685 = vpop.f32.mrb[0].mxu0
        %686 = vdwg.mxu0
        %vm687 = vcmask 80896
        %688 = vst.msk [vmem:[%s277] sm:$0xff] %vm687, %v657
        %689 = vst.msk [vmem:[%s277 + $0x8] sm:$0xff] %vm687, %v660
        %690 = vst.msk [vmem:[%s277 + $0x10] sm:$0xff] %vm687, %v665
        %691 = vst.msk [vmem:[%s277 + $0x18] sm:$0xff] %vm687, %v668
        %692 = vst.msk [vmem:[%s277 + $0x20] sm:$0xff] %vm687, %v673
        %693 = vst.msk [vmem:[%s277 + $0x28] sm:$0xff] %vm687, %v676
        %694 = vst.msk [vmem:[%s277 + $0x30] sm:$0xff] %vm687, %v681
        %695 = vst.msk [vmem:[%s277 + $0x38] sm:$0xff] %vm687, %v684
        %s696 = sand.u32 %s180, 1
        %s697 = scalar_lea.sflag [#allocation3], %s696
        %s698 = sand.u32 %s180, 1
        %s699 = smul.addr %s698, 64
        %s700 = scalar_lea.vmem [#allocation2], %s699
        // Predicated region
        $region45: #{relative_attr_predictor.5} parent=43 // pred_check
          %p701 = pneg %p190
        $region46: #{relative_attr_predictor.5} parent=43 // pred_check_branch
          %703 = sbr.rel (%p701) target = $region48
        $region47: #{relative_attr_predictor.5} parent=43 // pred_region
          %s704 = smul.u32 8, %s25
          %s706 = ssub.s32 1024, 1024
          %707 = vsyncadd %s697, %s706
          %s708 = smul.addr %s24, 8
          %s709 = sadd.s32 %s704, %s708
          %s710 = smul.addr %s709, 128
          %s711 = scalar_lea.hbm %s6, %s710
          %s712 = sshll.u32 %s700, 4
          %s713 = int_to_ptr.vmem [resolvable:$true] %s712
          %718 = dma.vmem_to_hbm [thread:$0]  %s713, 1024, %s711, %s697, 128, 128, 8
        $region48: #{relative_attr_predictor.5} parent=43 // pred_fallthru
          _
      $region44: #{relative_attr_predictor.5} parent=5 // pred_fallthru
        _
      %p719 = scmp.le.s32.totalorder 2, %s15
      // Predicated region
      $region49: #{relative_attr_predictor.5} parent=5 // pred_check
        %p720 = pneg %p719
      $region50: #{relative_attr_predictor.5} parent=5 // pred_check_branch
        %722 = sbr.rel (%p720) target = $region52
      $region51: #{relative_attr_predictor.5} parent=5 // pred_region
        %s723 = ssub.s32 %s15, 2
        // Predicated region
        $region53: #{relative_attr_predictor.5} parent=51 // pred_check
          %p724 = pneg %p196
        $region54: #{relative_attr_predictor.5} parent=51 // pred_check_branch
          %726 = sbr.rel (%p724) target = $region56
        $region55: #{relative_attr_predictor.5} parent=51 // pred_region
          %s727 = sand.u32 %s181, 1
          %s728 = scalar_lea.sflag [#allocation3], %s727
          %s729 = sand.u32 %s181, 1
          %s730 = smul.addr %s729, 64
          %s731 = scalar_lea.vmem [#allocation2], %s730
          %732 = dma.done %s728, 1024
        $region56: #{relative_attr_predictor.5} parent=51 // pred_fallthru
          _
      $region52: #{relative_attr_predictor.5} parent=5 // pred_fallthru
        _
    $region6: #{relative_attr_predictor.5} parent=1 // loop_footer
      %s19 = sadd.s32 1, %s15
    $region7: #{relative_attr_predictor.5} parent=1 // loop_footer_branch
      %14 = sbr.rel target = $region3
    $region8: #{relative_attr_predictor.5} parent=1 // loop_exit
      _
    %733 = vsyncpa [#allocation3], 1
    %s734 = scalar_lea.sflag [#allocation3], 1
    %735 = vsyncpa %s734, 1

</llo_original>
